<compile_context>
chip_gen: v6e
topology: v6e:2x2x1
jax: 0.10.0
libtpu: 0.0.40
codegen_flags: <defaults>
</compile_context>

<pallas_src>
import functools

import jax
import jax.numpy as jnp
import numpy as np
from jax.experimental import pallas as pl
from jax.experimental.pallas import tpu as pltpu


def _round_up(x: int, m: int) -> int:
    return ((x + m - 1) // m) * m


def _pool_windows(in_size: int, out_size: int):
    """PyTorch adaptive-pool windows: 0/1 membership mask + window lengths."""
    mask = np.zeros((out_size, in_size), dtype=np.float32)
    counts = np.zeros((out_size,), dtype=np.float32)
    for i in range(out_size):
        start = (i * in_size) // out_size
        end = ((i + 1) * in_size + out_size - 1) // out_size  # ceil
        mask[i, start:end] = 1.0
        counts[i] = float(end - start)
    return mask, counts


def _pool_gemm_kernel(x_ref, kt_ref, scale_ref, o_ref, acc_ref, *, bk, kt_resident):
    # x_ref:     (bm, bk)            slab of flattened image planes
    # kt_ref:    (hw_pad, OHW_PAD)   resident 0/1 mask  (or (bk, OHW_PAD) if tiled)
    # scale_ref: (1, OHW_PAD)        f32 per-output-column 1/window_size
    # o_ref:     (bm, OHW_PAD)       lane-dense output slab
    # acc_ref:   (bm, OHW_PAD)       f32 accumulator scratch
    k = pl.program_id(1)

    @pl.when(k == 0)
    def _():
        acc_ref[...] = jnp.zeros_like(acc_ref)

    if kt_resident:
        k0 = pl.multiple_of(k * bk, bk)
        kt_blk = kt_ref[pl.ds(k0, bk), :]
    else:
        kt_blk = kt_ref[...]

    acc_ref[...] += jnp.dot(x_ref[...], kt_blk.astype(x_ref.dtype),
                            preferred_element_type=jnp.float32)

    @pl.when(k == pl.num_programs(1) - 1)
    def _():
        o_ref[...] = (acc_ref[...] * scale_ref[...]).astype(o_ref.dtype)


@functools.partial(jax.jit, static_argnames=("out_h", "out_w"))
def adaptive_avg_pool2d(x1, x2=None, *, out_h=10, out_w=10):
    """Equivalent of Model.forward: F.adaptive_avg_pool2d(x1, [out_h, out_w]).
    x2 is accepted (to match the PyTorch signature) but unused by the forward."""
    del x2
    N, C, H, W = x1.shape
    M, HW, OHW = N * C, H * W, out_h * out_w
    OHW_PAD = _round_up(OHW, 128)

    in_dtype = x1.dtype if jnp.issubdtype(x1.dtype, jnp.floating) else jnp.float32
    out_dtype = in_dtype  # PyTorch preserves the input dtype

    # --- host-side weight construction --------------------------------------
    mh, ch = _pool_windows(H, out_h)
    mw, cw = _pool_windows(W, out_w)
    # kron(mh, mw)[o*OW + p, h*W + w] = mh[o,h]*mw[p,w]  (matches row-major flatten)
    kt_np = np.kron(mh, mw).T                                  # (HW, OHW) 0/1 mask
    scale_np = np.zeros((1, OHW_PAD), dtype=np.float32)
    scale_np[0, :OHW] = 1.0 / np.outer(ch, cw).reshape(-1)     # 1/(len_h * len_w)

    # --- tile sizes ----------------------------------------------------------
    # Pad HW only to a multiple of 128, then take bk as the largest divisor of
    # hw_pad that is a multiple of 128 and <= 2048 (minimal x padding, big tiles).
    hw_pad = _round_up(HW, 128)
    q = hw_pad // 128
    d = max(dd for dd in range(1, min(q, 16) + 1) if q % dd == 0)
    bk = 128 * d

    # bm aligned to the dtype's sublane packing; up to 512 rows per step.
    sub = {1: 32, 2: 16, 4: 8}.get(jnp.dtype(in_dtype).itemsize, 8)
    bm = min(512, _round_up(M, sub))
    m_pad = _round_up(M, bm)

    # --- operand prep --------------------------------------------------------
    x_flat = x1.reshape(M, HW).astype(in_dtype)
    if (m_pad, hw_pad) != (M, HW):
        x_flat = jnp.pad(x_flat, ((0, m_pad - M), (0, hw_pad - HW)))

    kt_pad = np.zeros((hw_pad, OHW_PAD), dtype=np.float32)
    kt_pad[:HW, :OHW] = kt_np
    kt = jnp.asarray(kt_pad, dtype=jnp.bfloat16)   # 0/1 is exact in bf16
    scale = jnp.asarray(scale_np)                  # stays f32

    # --- VMEM budgeting / kt residency decision ------------------------------
    in_sz = jnp.dtype(in_dtype).itemsize
    out_sz = jnp.dtype(out_dtype).itemsize
    kt_bytes = hw_pad * OHW_PAD * 2
    buf_bytes = (2 * bm * bk * in_sz            # double-buffered x blocks
                 + 2 * bm * OHW_PAD * out_sz    # double-buffered out blocks
                 + bm * OHW_PAD * 4             # f32 accumulator
                 + OHW_PAD * 4)                 # scale vector
    kt_resident = (2 * kt_bytes + buf_bytes) <= (40 << 20)   # safe on v7x (64 MiB)
    need = (2 * kt_bytes if kt_resident else 4 * bk * OHW_PAD * 2) + buf_bytes
    vmem_limit = int(min(48 << 20, max(32 << 20, need + (4 << 20))))

    if kt_resident:
        kt_spec = pl.BlockSpec((hw_pad, OHW_PAD), lambda i, k: (0, 0))   # resident
    else:
        kt_spec = pl.BlockSpec((bk, OHW_PAD), lambda i, k: (k, 0))       # tiled

    kt_reads = 1 if kt_resident else (m_pad // bm)
    cost = pl.CostEstimate(
        flops=2 * m_pad * hw_pad * OHW_PAD,
        transcendentals=0,
        bytes_accessed=(m_pad * hw_pad * in_sz
                        + kt_reads * kt_bytes
                        + OHW_PAD * 4
                        + m_pad * OHW_PAD * out_sz))

    kernel = functools.partial(_pool_gemm_kernel, bk=bk, kt_resident=kt_resident)

    out_flat = pl.pallas_call(
        kernel,
        out_shape=jax.ShapeDtypeStruct((m_pad, OHW_PAD), out_dtype),
        grid_spec=pltpu.PrefetchScalarGridSpec(
            num_scalar_prefetch=0,
            grid=(m_pad // bm, hw_pad // bk),
            in_specs=[
                pl.BlockSpec((bm, bk), lambda i, k: (i, k)),
                kt_spec,
                pl.BlockSpec((1, OHW_PAD), lambda i, k: (0, 0)),
            ],
            out_specs=pl.BlockSpec((bm, OHW_PAD), lambda i, k: (i, 0)),
            scratch_shapes=[pltpu.VMEM((bm, OHW_PAD), jnp.float32)],
        ),
        compiler_params=pltpu.CompilerParams(
            dimension_semantics=("parallel", "arbitrary"),
            vmem_limit_bytes=vmem_limit),
        cost_estimate=cost,
    )(x_flat, kt, scale)

    return out_flat[:M, :OHW].reshape(N, C, out_h, out_w)


def _reference(x1, out_h=10, out_w=10):
    """Plain-JAX reference of adaptive_avg_pool2d for sanity checking."""
    N, C, H, W = x1.shape
    mh, ch = _pool_windows(H, out_h)
    mw, cw = _pool_windows(W, out_w)
    ph = jnp.asarray(mh / ch[:, None])
    pw = jnp.asarray(mw / cw[:, None])
    return jnp.einsum("oh,nchw,pw->ncop", ph, x1.astype(jnp.float32), pw)


if __name__ == "__main__":
    key = jax.random.PRNGKey(0)
    k1, k2 = jax.random.split(key)
    # Small shapes consistent with the module's NCHW input (3 channels, square
    # spatial); 64x64 also exercises the multi-step K reduction and M padding.
    x1 = jax.random.normal(k1, (2, 3, 64, 64), dtype=jnp.float32)
    x2 = jax.random.normal(k2, (2, 3, 64, 64), dtype=jnp.float32)  # unused by forward

    out = adaptive_avg_pool2d(x1, x2)
    out = jax.block_until_ready(out)

    ref = _reference(x1)
    assert out.shape == (2, 3, 10, 10), out.shape
    np.testing.assert_allclose(np.asarray(out), np.asarray(ref),
                               rtol=1e-5, atol=1e-5)
    print("KERNEL_OK")
</pallas_src>

<mosaic_0001>
module attributes {stable_mosaic.version = 11 : i64} {
  func.func @_pool_gemm_kernel(%arg0: i32, %arg1: i32, %arg2: memref<8x2048xf32, #tpu.memory_space<vmem>>, %arg3: memref<4096x128xbf16, #tpu.memory_space<vmem>>, %arg4: memref<1x128xf32, #tpu.memory_space<vmem>>, %arg5: memref<8x128xf32, #tpu.memory_space<vmem>>, %arg6: memref<8x128xf32, #tpu.memory_space<vmem>>) attributes {dimension_semantics = [#tpu.dimension_semantics<parallel>, #tpu.dimension_semantics<arbitrary>], iteration_bounds = array<i64: 1, 2>, scalar_prefetch = 0 : i64, scratch_operands = 1 : i64, tpu.core_type = #tpu.core_type<tc>, window_params = [{transform_indices = @transform_0, window_bounds = array<i64: 8, 2048>}, {pipeline_mode = #tpu.pipeline_mode<synchronous>, transform_indices = @transform_1, window_bounds = array<i64: 4096, 128>}, {pipeline_mode = #tpu.pipeline_mode<synchronous>, transform_indices = @transform_2, window_bounds = array<i64: 1, 128>}, {transform_indices = @transform_3, window_bounds = array<i64: 8, 128>}]} {
    %c0_i32 = arith.constant 0 : i32
    %0 = arith.cmpi eq, %arg1, %c0_i32 : i32
    %1 = arith.extui %0 : i1 to i32
    %c0_i32_0 = arith.constant 0 : i32
    %2 = arith.cmpi ne, %1, %c0_i32_0 : i32
    scf.if %2 {
      %cst_8 = arith.constant 0.000000e+00 : f32
      %16 = vector.broadcast %cst_8 : f32 to vector<8x128xf32>
      %c0_9 = arith.constant 0 : index
      %c0_10 = arith.constant 0 : index
      %17 = vector.load %arg6[%c0_9, %c0_10] : memref<8x128xf32, #tpu.memory_space<vmem>>, vector<8x128xf32>
      tpu.vector_store %arg6[%c0_9, %c0_10], %16 {strides = array<i32>} : memref<8x128xf32, #tpu.memory_space<vmem>>, vector<8x128xf32>,
    } else {
    }
    %c2048_i32 = arith.constant 2048 : i32
    %3 = arith.muli %arg1, %c2048_i32 : i32
    %4 = tpu.assume_multiple %3, 2048 : i32
    %5 = arith.index_cast %4 : i32 to index
    %c0 = arith.constant 0 : index
    %6 = vector.load %arg3[%5, %c0] : memref<4096x128xbf16, #tpu.memory_space<vmem>>, vector<2048x128xbf16>
    %c0_1 = arith.constant 0 : index
    %c0_2 = arith.constant 0 : index
    %7 = vector.load %arg6[%c0_1, %c0_2] : memref<8x128xf32, #tpu.memory_space<vmem>>, vector<8x128xf32>
    %c0_3 = arith.constant 0 : index
    %c0_4 = arith.constant 0 : index
    %8 = vector.load %arg2[%c0_3, %c0_4] : memref<8x2048xf32, #tpu.memory_space<vmem>>, vector<8x2048xf32>
    %9 = arith.extf %6 : vector<2048x128xbf16> to vector<2048x128xf32>
    %cst = arith.constant dense<0.000000e+00> : vector<8x128xf32>
    %10 = tpu.matmul %8, %9, %cst {dimension_numbers = #tpu.dot_dimension_numbers<[1], [0], [0], [1], [0, 0, 1, 1], [], []>} : vector<8x2048xf32>, vector<2048x128xf32>, vector<8x128xf32> -> vector<8x128xf32>
    %11 = arith.addf %7, %10 : vector<8x128xf32>
    %c0_5 = arith.constant 0 : index
    %c0_6 = arith.constant 0 : index
    %12 = vector.load %arg6[%c0_5, %c0_6] : memref<8x128xf32, #tpu.memory_space<vmem>>, vector<8x128xf32>
    tpu.vector_store %arg6[%c0_5, %c0_6], %11 {strides = array<i32>} : memref<8x128xf32, #tpu.memory_space<vmem>>, vector<8x128xf32>,
    %c1_i32 = arith.constant 1 : i32
    %13 = arith.cmpi eq, %arg1, %c1_i32 : i32
    %14 = arith.extui %13 : i1 to i32
    %c0_i32_7 = arith.constant 0 : i32
    %15 = arith.cmpi ne, %14, %c0_i32_7 : i32
    scf.if %15 {
      %c0_8 = arith.constant 0 : index
      %c0_9 = arith.constant 0 : index
      %16 = vector.load %arg6[%c0_8, %c0_9] : memref<8x128xf32, #tpu.memory_space<vmem>>, vector<8x128xf32>
      %c0_10 = arith.constant 0 : index
      %c0_11 = arith.constant 0 : index
      %17 = vector.load %arg4[%c0_10, %c0_11] : memref<1x128xf32, #tpu.memory_space<vmem>>, vector<1x128xf32>
      %18 = vector.broadcast %17 : vector<1x128xf32> to vector<8x128xf32>
      %19 = arith.mulf %16, %18 : vector<8x128xf32>
      %c0_12 = arith.constant 0 : index
      %c0_13 = arith.constant 0 : index
      %20 = vector.load %arg5[%c0_12, %c0_13] : memref<8x128xf32, #tpu.memory_space<vmem>>, vector<8x128xf32>
      tpu.vector_store %arg5[%c0_12, %c0_13], %19 {strides = array<i32>} : memref<8x128xf32, #tpu.memory_space<vmem>>, vector<8x128xf32>,
    } else {
    }
    return
  }
  func.func @transform_0(%arg0: i32, %arg1: i32) -> (i32, i32) {
    %c0_i32 = arith.constant 0 : i32
    return %arg0, %arg1 : i32, i32
  }
  func.func @transform_1(%arg0: i32, %arg1: i32) -> (i32, i32) {
    %c0_i32 = arith.constant 0 : i32
    %c0_i32_0 = arith.constant 0 : i32
    %c0_i32_1 = arith.constant 0 : i32
    return %c0_i32, %c0_i32_0 : i32, i32
  }
  func.func @transform_2(%arg0: i32, %arg1: i32) -> (i32, i32) {
    %c0_i32 = arith.constant 0 : i32
    %c0_i32_0 = arith.constant 0 : i32
    %c0_i32_1 = arith.constant 0 : i32
    return %c0_i32, %c0_i32_0 : i32, i32
  }
  func.func @transform_3(%arg0: i32, %arg1: i32) -> (i32, i32) {
    %c0_i32 = arith.constant 0 : i32
    %c0_i32_0 = arith.constant 0 : i32
    return %arg0, %c0_i32 : i32, i32
  }
}

</mosaic_0001>

<llo_original>
// kernel: adaptive_avg_pool2d.1
$region0: #{adaptive_avg_pool2d.1}
  #allocation0 [shape = 'u32[]', space=smem, size = 0x4, offset = 0x4, fixed_abs, tag = 'smem constant byte address 0x4 - core index']
  #allocation1 [shape = 'u32[144,128]{1,0:T(1,128)}', space=vmem, size = 0x12000, scoped, tag = 'internal scratch']
  #allocation2 [shape = 'f32[8,128]{1,0:T(8,128)}', space=vmem, size = 0x1000, scoped, tag = 'scratch operand']
  %s0 = inlined_call_operand.vmem [shape: f32[8,4096], index: 0, kind: input, shape index: {}]
  %s1 = inlined_call_operand.hbm [shape: bf16[4096,128], index: 1, kind: input, shape index: {}]
  %s2 = inlined_call_operand.vmem [shape: f32[1,128], index: 2, kind: input, shape index: {}]
  %s3 = inlined_call_operand.vmem [shape: f32[8,128], index: 3, kind: output, shape index: {}]
  %s4 = sld [smem:[#allocation0]]
  $region57: #{adaptive_avg_pool2d.1} parent=0
    _
  %s6 = ssub.s32 1, %s4
  %s7 = scalar_select 0, %s6, %s4
  $region1: #{adaptive_avg_pool2d.1} parent=0
    #allocation3 [shape = 'u8[1048576]{0}', space=vmem, size = 0x100000, scoped, tag = 'input window, operand 1, single buffered']
    #allocation4 [shape = 's32[2]{0}', space=sflag, size = 0x8, scoped, tag = 'scoped memory for adaptive_avg_pool2d.1']
    %8 = vsyncpa [#allocation4], 0
    loop: start=0, step=1, limit=4
    $region2: #{adaptive_avg_pool2d.1} parent=1 // loop_pre_header
      _
    $region3: #{adaptive_avg_pool2d.1} parent=1 // loop_header
      %s10 = sphi 0, %s14
      %p11 = scmp.ge.s32.totalorder %s10, 4
      %s17 = sphi 0, %s29
      %s18 = sphi 0, %s25
      %s19 = sphi 0, %s17
      %s20 = sphi 0, %s18
      %s21 = sphi 0, %s19
      %s22 = sphi 0, %s20
      %s34 = sphi 0, %s36
      %s37 = sphi 0, %s34
      %s38 = sphi 0, %s37
      %s54 = sphi 0, %s38
      %s58 = sphi 0, %s58
      %s60 = sphi 0, %s58
      %s61 = sphi 0, %s60
      %s75 = sphi 0, %s61
      %s79 = sphi 0, %s79
      %s81 = sphi 0, %s79
      %s82 = sphi 0, %s81
      %s96 = sphi 0, %s82
      %s102 = sphi 0, %s104
      %s105 = sphi 0, %s102
      %s106 = sphi 0, %s105
      %s122 = sphi 0, %s106
    $region4: #{adaptive_avg_pool2d.1} parent=1 // loop_header_branch
      %13 = sbr.rel (%p11) target = $region8
    $region5: #{adaptive_avg_pool2d.1} parent=1 // loop_body
      %s15 = ssub.s32 %s10, 1
      %s16 = ssub.s32 %s10, 2
      %s23 = sadd.s32 1, %s18
      %p24 = scmp.ge.s32.totalorder %s23, 2
      %s25 = scalar_select %p24, 0, %s23
      %s26 = sadd.s32 1, %s17
      %s27 = scalar_select %p24, %s26, %s17
      %p28 = scmp.ge.s32.totalorder %s27, 1
      %s29 = scalar_select %p28, 0, %s27
      %s30 = ssub.s32 %s17, %s29
      %s31 = ssub.s32 %s18, %s25
      %s32 = sor.u32 %s30, %s31
      %p33 = scmp.eq.s32.totalorder %s32, 0
      %s35 = sadd.s32 %s34, 1
      %s36 = scalar_select %p33, %s34, %s35
      %p39 = pneg %p33
      %p40 = scmp.eq.s32.totalorder %s10, 1
      %p41 = por %p39, %p40
      %p42 = scmp.ne.s32.totalorder %s34, %s37
      %p43 = scmp.eq.s32.totalorder %s10, 0
      %p44 = por %p42, %p43
      %p45 = scmp.ne.s32.totalorder %s34, %s37
      %p46 = scmp.eq.s32.totalorder %s15, 1
      %p47 = por %p45, %p46
      %p48 = scmp.ne.s32.totalorder %s37, %s38
      %p49 = scmp.eq.s32.totalorder %s15, 0
      %p50 = por %p48, %p49
      %p51 = scmp.ne.s32.totalorder %s37, %s38
      %p52 = scmp.eq.s32.totalorder %s16, 1
      %p53 = por %p51, %p52
      %p55 = scmp.ne.s32.totalorder %s38, %s54
      %p56 = scmp.eq.s32.totalorder %s16, 0
      %p57 = por %p55, %p56
      %s59 = sadd.s32 %s58, 1
      %p62 = scmp.eq.s32.totalorder %s10, 1
      %p63 = scmp.ne.s32.totalorder %s58, %s60
      %p64 = scmp.eq.s32.totalorder %s10, 0
      %p65 = por %p63, %p64
      %p66 = scmp.ne.s32.totalorder %s58, %s60
      %p67 = scmp.eq.s32.totalorder %s15, 1
      %p68 = por %p66, %p67
      %p69 = scmp.ne.s32.totalorder %s60, %s61
      %p70 = scmp.eq.s32.totalorder %s15, 0
      %p71 = por %p69, %p70
      %p72 = scmp.ne.s32.totalorder %s60, %s61
      %p73 = scmp.eq.s32.totalorder %s16, 1
      %p74 = por %p72, %p73
      %p76 = scmp.ne.s32.totalorder %s61, %s75
      %p77 = scmp.eq.s32.totalorder %s16, 0
      %p78 = por %p76, %p77
      %s80 = sadd.s32 %s79, 1
      %p83 = scmp.eq.s32.totalorder %s10, 1
      %p84 = scmp.ne.s32.totalorder %s79, %s81
      %p85 = scmp.eq.s32.totalorder %s10, 0
      %p86 = por %p84, %p85
      %p87 = scmp.ne.s32.totalorder %s79, %s81
      %p88 = scmp.eq.s32.totalorder %s15, 1
      %p89 = por %p87, %p88
      %p90 = scmp.ne.s32.totalorder %s81, %s82
      %p91 = scmp.eq.s32.totalorder %s15, 0
      %p92 = por %p90, %p91
      %p93 = scmp.ne.s32.totalorder %s81, %s82
      %p94 = scmp.eq.s32.totalorder %s16, 1
      %p95 = por %p93, %p94
      %p97 = scmp.ne.s32.totalorder %s82, %s96
      %p98 = scmp.eq.s32.totalorder %s16, 0
      %p99 = por %p97, %p98
      %s100 = ssub.s32 %s17, %s29
      %p101 = scmp.eq.s32.totalorder %s100, 0
      %s103 = sadd.s32 %s102, 1
      %s104 = scalar_select %p101, %s102, %s103
      %p107 = pneg %p101
      %p108 = scmp.eq.s32.totalorder %s10, 1
      %p109 = por %p107, %p108
      %p110 = scmp.ne.s32.totalorder %s102, %s105
      %p111 = scmp.eq.s32.totalorder %s10, 0
      %p112 = por %p110, %p111
      %p113 = scmp.ne.s32.totalorder %s102, %s105
      %p114 = scmp.eq.s32.totalorder %s15, 1
      %p115 = por %p113, %p114
      %p116 = scmp.ne.s32.totalorder %s105, %s106
      %p117 = scmp.eq.s32.totalorder %s15, 0
      %p118 = por %p116, %p117
      %p119 = scmp.ne.s32.totalorder %s105, %s106
      %p120 = scmp.eq.s32.totalorder %s16, 1
      %p121 = por %p119, %p120
      %p123 = scmp.ne.s32.totalorder %s106, %s122
      %p124 = scmp.eq.s32.totalorder %s16, 0
      %p125 = por %p123, %p124
      %p126 = scmp.le.s32.totalorder 1, %s10
      %p127 = scmp.lt.s32.totalorder %s10, 3
      %p128 = pnand %p126, %p127
      %p129 = pneg %p128
      // Predicated region
      $region9: #{adaptive_avg_pool2d.1} parent=5 // pred_check
        _
      $region10: #{adaptive_avg_pool2d.1} parent=5 // pred_check_branch
        %131 = sbr.rel (%p128) target = $region12
      $region11: #{adaptive_avg_pool2d.1} parent=5 // pred_region
        %s132 = ssub.s32 %s10, 1
        // Predicated region
        $region13: #{adaptive_avg_pool2d.1} parent=11 // pred_check
          %p133 = pneg %p71
        $region14: #{adaptive_avg_pool2d.1} parent=11 // pred_check_branch
          %135 = sbr.rel (%p133) target = $region16
        $region15: #{adaptive_avg_pool2d.1} parent=11 // pred_region
          %s137 = ssub.s32 32768, 32768
          %138 = vsyncadd [#allocation4], %s137
          %s139 = sshll.u32 [#allocation3], 4
          %s140 = int_to_ptr.vmem [resolvable:$true] %s139
          %145 = dma.hbm_to_vmem [thread:$0]  %s1, 32768, %s140, [#allocation4], 64, 64, 4
        $region16: #{adaptive_avg_pool2d.1} parent=11 // pred_fallthru
          _
        // Predicated region
        $region17: #{adaptive_avg_pool2d.1} parent=11 // pred_check
          %p146 = pneg %p92
        $region18: #{adaptive_avg_pool2d.1} parent=11 // pred_check_branch
          %148 = sbr.rel (%p146) target = $region20
        $region19: #{adaptive_avg_pool2d.1} parent=11 // pred_region
          _
        $region20: #{adaptive_avg_pool2d.1} parent=11 // pred_fallthru
          _
      $region12: #{adaptive_avg_pool2d.1} parent=5 // pred_fallthru
        _
      %p149 = scmp.lt.s32.totalorder %s10, 2
      // Predicated region
      $region21: #{adaptive_avg_pool2d.1} parent=5 // pred_check
        %p150 = pneg %p149
      $region22: #{adaptive_avg_pool2d.1} parent=5 // pred_check_branch
        %152 = sbr.rel (%p150) target = $region24
      $region23: #{adaptive_avg_pool2d.1} parent=5 // pred_region
        // Predicated region
        $region25: #{adaptive_avg_pool2d.1} parent=23 // pred_check
          %p153 = pneg %p44
        $region26: #{adaptive_avg_pool2d.1} parent=23 // pred_check_branch
          %155 = sbr.rel (%p153) target = $region28
        $region27: #{adaptive_avg_pool2d.1} parent=23 // pred_region
          %s156 = smul.u32 16, %s18
          %p157 = scmp.lt.s32.totalorder %s17, 0
          %s158 = scalar_select %p157, %s17, 0
          %p159 = scmp.lt.s32.totalorder %s156, 31
          %s160 = scalar_select %p159, %s156, 31
          %s161 = smul.addr %s158, 32
          %s162 = sadd.s32 %s160, %s161
          %s163 = smul.addr %s162, 8
          %s164 = scalar_lea.vmem %s0, %s163
          %s165 = smul.u32 16, %s18
        $region28: #{adaptive_avg_pool2d.1} parent=23 // pred_fallthru
          _
      $region24: #{adaptive_avg_pool2d.1} parent=5 // pred_fallthru
        _
      %p166 = scmp.le.s32.totalorder 1, %s10
      %p167 = scmp.lt.s32.totalorder %s10, 3
      %p168 = pnand %p166, %p167
      %p169 = pneg %p168
      // Predicated region
      $region29: #{adaptive_avg_pool2d.1} parent=5 // pred_check
        _
      $region30: #{adaptive_avg_pool2d.1} parent=5 // pred_check_branch
        %171 = sbr.rel (%p168) target = $region32
      $region31: #{adaptive_avg_pool2d.1} parent=5 // pred_region
        %s172 = ssub.s32 %s10, 1
        // Predicated region
        $region33: #{adaptive_avg_pool2d.1} parent=31 // pred_check
          %p173 = pneg %p71
        $region34: #{adaptive_avg_pool2d.1} parent=31 // pred_check_branch
          %175 = sbr.rel (%p173) target = $region36
        $region35: #{adaptive_avg_pool2d.1} parent=31 // pred_region
          %176 = dma.done [#allocation4], 32768
        $region36: #{adaptive_avg_pool2d.1} parent=31 // pred_fallthru
          _
        %s177 = smul.u32 16, %s20
        %p178 = scmp.lt.s32.totalorder %s19, 0
        %s179 = scalar_select %p178, %s19, 0
        %p180 = scmp.lt.s32.totalorder %s177, 31
        %s181 = scalar_select %p180, %s177, 31
        %s182 = smul.addr %s179, 32
        %s183 = sadd.s32 %s181, %s182
        %s184 = smul.addr %s183, 8
        %s185 = scalar_lea.vmem %s0, %s184
        %p186 = pneg %p50
        %p187 = pneg %p47
        %p188 = pneg %p71
        %p189 = pneg %p68
        %p190 = pneg %p92
        %p191 = pneg %p89
        %p192 = pneg %p118
        %p193 = pneg %p115
        %p194 = scmp.lt.s32.totalorder %s19, 0
        %s195 = scalar_select %p194, %s19, 0
        %s196 = smul.addr %s195, 8
        %s197 = scalar_lea.vmem %s3, %s196
        %s198 = smul.u32 16, %s20
        %p199 = scmp.lt.s32.totalorder %s19, 0
        %s200 = scalar_select %p199, %s19, 0
        %p201 = scmp.lt.s32.totalorder %s198, 31
        %s202 = scalar_select %p201, %s198, 31
        %s203 = smul.addr %s200, 32
        %s204 = sadd.s32 %s202, %s203
        %s205 = smul.addr %s204, 8
        %s206 = scalar_lea.vmem %s0, %s205
        %s207 = smul.u32 16, %s20
        %p208 = scmp.lt.s32.totalorder %s19, 0
        %s209 = scalar_select %p208, %s19, 0
        %s210 = smul.addr %s209, 8
        %s211 = scalar_lea.vmem %s3, %s210
        %p212 = scmp.eq.s32.totalorder %s20, 0
        // Predicated region
        $region37: #{adaptive_avg_pool2d.1} parent=31 // pred_check
          %p213 = pneg %p212
        $region38: #{adaptive_avg_pool2d.1} parent=31 // pred_check_branch
          %215 = sbr.rel (%p213) target = $region40
        $region39: #{adaptive_avg_pool2d.1} parent=31 // pred_region
          %216 = vst [vmem:[#allocation2] sm:$0xff] 0.0
        $region40: #{adaptive_avg_pool2d.1} parent=31 // pred_fallthru
          _
        %s217 = smul.u32 %s20, 2048
        %s218 = sshra.s32 %s217, 3
        %s219 = sand.u32 %s217, 7
        %s220 = smul.addr %s218, 4
        %s221 = scalar_lea.vmem [#allocation3], %s220
        %v222 = vld [vmem:[%s221] sm:$0xf]
        %v223 = vld [vmem:[%s221 + $0x4] sm:$0xf]
        %v224 = vld [vmem:[%s221 + $0x8] sm:$0xf]
        %v225 = vld [vmem:[%s221 + $0xc] sm:$0xf]
        %v226 = vld [vmem:[%s221 + $0x10] sm:$0xf]
        %v227 = vld [vmem:[%s221 + $0x14] sm:$0xf]
        %v228 = vld [vmem:[%s221 + $0x18] sm:$0xf]
        %v229 = vld [vmem:[%s221 + $0x1c] sm:$0xf]
        %v230 = vld [vmem:[%s221 + $0x20] sm:$0xf]
        %v231 = vld [vmem:[%s221 + $0x24] sm:$0xf]
        %v232 = vld [vmem:[%s221 + $0x28] sm:$0xf]
        %v233 = vld [vmem:[%s221 + $0x2c] sm:$0xf]
        %v234 = vld [vmem:[%s221 + $0x30] sm:$0xf]
        %v235 = vld [vmem:[%s221 + $0x34] sm:$0xf]
        %v236 = vld [vmem:[%s221 + $0x38] sm:$0xf]
        %v237 = vld [vmem:[%s221 + $0x3c] sm:$0xf]
        %v238 = vld [vmem:[%s221 + $0x40] sm:$0xf]
        %v239 = vld [vmem:[%s221 + $0x44] sm:$0xf]
        %v240 = vld [vmem:[%s221 + $0x48] sm:$0xf]
        %v241 = vld [vmem:[%s221 + $0x4c] sm:$0xf]
        %v242 = vld [vmem:[%s221 + $0x50] sm:$0xf]
        %v243 = vld [vmem:[%s221 + $0x54] sm:$0xf]
        %v244 = vld [vmem:[%s221 + $0x58] sm:$0xf]
        %v245 = vld [vmem:[%s221 + $0x5c] sm:$0xf]
        %v246 = vld [vmem:[%s221 + $0x60] sm:$0xf]
        %v247 = vld [vmem:[%s221 + $0x64] sm:$0xf]
        %v248 = vld [vmem:[%s221 + $0x68] sm:$0xf]
        %v249 = vld [vmem:[%s221 + $0x6c] sm:$0xf]
        %v250 = vld [vmem:[%s221 + $0x70] sm:$0xf]
        %v251 = vld [vmem:[%s221 + $0x74] sm:$0xf]
        %v252 = vld [vmem:[%s221 + $0x78] sm:$0xf]
        %v253 = vld [vmem:[%s221 + $0x7c] sm:$0xf]
        %v254 = vld [vmem:[%s221 + $0x80] sm:$0xf]
        %v255 = vld [vmem:[%s221 + $0x84] sm:$0xf]
        %v256 = vld [vmem:[%s221 + $0x88] sm:$0xf]
        %v257 = vld [vmem:[%s221 + $0x8c] sm:$0xf]
        %v258 = vld [vmem:[%s221 + $0x90] sm:$0xf]
        %v259 = vld [vmem:[%s221 + $0x94] sm:$0xf]
        %v260 = vld [vmem:[%s221 + $0x98] sm:$0xf]
        %v261 = vld [vmem:[%s221 + $0x9c] sm:$0xf]
        %v262 = vld [vmem:[%s221 + $0xa0] sm:$0xf]
        %v263 = vld [vmem:[%s221 + $0xa4] sm:$0xf]
        %v264 = vld [vmem:[%s221 + $0xa8] sm:$0xf]
        %v265 = vld [vmem:[%s221 + $0xac] sm:$0xf]
        %v266 = vld [vmem:[%s221 + $0xb0] sm:$0xf]
        %v267 = vld [vmem:[%s221 + $0xb4] sm:$0xf]
        %v268 = vld [vmem:[%s221 + $0xb8] sm:$0xf]
        %v269 = vld [vmem:[%s221 + $0xbc] sm:$0xf]
        %v270 = vld [vmem:[%s221 + $0xc0] sm:$0xf]
        %v271 = vld [vmem:[%s221 + $0xc4] sm:$0xf]
        %v272 = vld [vmem:[%s221 + $0xc8] sm:$0xf]
        %v273 = vld [vmem:[%s221 + $0xcc] sm:$0xf]
        %v274 = vld [vmem:[%s221 + $0xd0] sm:$0xf]
        %v275 = vld [vmem:[%s221 + $0xd4] sm:$0xf]
        %v276 = vld [vmem:[%s221 + $0xd8] sm:$0xf]
        %v277 = vld [vmem:[%s221 + $0xdc] sm:$0xf]
        %v278 = vld [vmem:[%s221 + $0xe0] sm:$0xf]
        %v279 = vld [vmem:[%s221 + $0xe4] sm:$0xf]
        %v280 = vld [vmem:[%s221 + $0xe8] sm:$0xf]
        %v281 = vld [vmem:[%s221 + $0xec] sm:$0xf]
        %v282 = vld [vmem:[%s221 + $0xf0] sm:$0xf]
        %v283 = vld [vmem:[%s221 + $0xf4] sm:$0xf]
        %v284 = vld [vmem:[%s221 + $0xf8] sm:$0xf]
        %v285 = vld [vmem:[%s221 + $0xfc] sm:$0xf]
        %v286 = vld [vmem:[%s221 + $0x100] sm:$0xf]
        %v287 = vld [vmem:[%s221 + $0x104] sm:$0xf]
        %v288 = vld [vmem:[%s221 + $0x108] sm:$0xf]
        %v289 = vld [vmem:[%s221 + $0x10c] sm:$0xf]
        %v290 = vld [vmem:[%s221 + $0x110] sm:$0xf]
        %v291 = vld [vmem:[%s221 + $0x114] sm:$0xf]
        %v292 = vld [vmem:[%s221 + $0x118] sm:$0xf]
        %v293 = vld [vmem:[%s221 + $0x11c] sm:$0xf]
        %v294 = vld [vmem:[%s221 + $0x120] sm:$0xf]
        %v295 = vld [vmem:[%s221 + $0x124] sm:$0xf]
        %v296 = vld [vmem:[%s221 + $0x128] sm:$0xf]
        %v297 = vld [vmem:[%s221 + $0x12c] sm:$0xf]
        %v298 = vld [vmem:[%s221 + $0x130] sm:$0xf]
        %v299 = vld [vmem:[%s221 + $0x134] sm:$0xf]
        %v300 = vld [vmem:[%s221 + $0x138] sm:$0xf]
        %v301 = vld [vmem:[%s221 + $0x13c] sm:$0xf]
        %v302 = vld [vmem:[%s221 + $0x140] sm:$0xf]
        %v303 = vld [vmem:[%s221 + $0x144] sm:$0xf]
        %v304 = vld [vmem:[%s221 + $0x148] sm:$0xf]
        %v305 = vld [vmem:[%s221 + $0x14c] sm:$0xf]
        %v306 = vld [vmem:[%s221 + $0x150] sm:$0xf]
        %v307 = vld [vmem:[%s221 + $0x154] sm:$0xf]
        %v308 = vld [vmem:[%s221 + $0x158] sm:$0xf]
        %v309 = vld [vmem:[%s221 + $0x15c] sm:$0xf]
        %v310 = vld [vmem:[%s221 + $0x160] sm:$0xf]
        %v311 = vld [vmem:[%s221 + $0x164] sm:$0xf]
        %v312 = vld [vmem:[%s221 + $0x168] sm:$0xf]
        %v313 = vld [vmem:[%s221 + $0x16c] sm:$0xf]
        %v314 = vld [vmem:[%s221 + $0x170] sm:$0xf]
        %v315 = vld [vmem:[%s221 + $0x174] sm:$0xf]
        %v316 = vld [vmem:[%s221 + $0x178] sm:$0xf]
        %v317 = vld [vmem:[%s221 + $0x17c] sm:$0xf]
        %v318 = vld [vmem:[%s221 + $0x180] sm:$0xf]
        %v319 = vld [vmem:[%s221 + $0x184] sm:$0xf]
        %v320 = vld [vmem:[%s221 + $0x188] sm:$0xf]
        %v321 = vld [vmem:[%s221 + $0x18c] sm:$0xf]
        %v322 = vld [vmem:[%s221 + $0x190] sm:$0xf]
        %v323 = vld [vmem:[%s221 + $0x194] sm:$0xf]
        %v324 = vld [vmem:[%s221 + $0x198] sm:$0xf]
        %v325 = vld [vmem:[%s221 + $0x19c] sm:$0xf]
        %v326 = vld [vmem:[%s221 + $0x1a0] sm:$0xf]
        %v327 = vld [vmem:[%s221 + $0x1a4] sm:$0xf]
        %v328 = vld [vmem:[%s221 + $0x1a8] sm:$0xf]
        %v329 = vld [vmem:[%s221 + $0x1ac] sm:$0xf]
        %v330 = vld [vmem:[%s221 + $0x1b0] sm:$0xf]
        %v331 = vld [vmem:[%s221 + $0x1b4] sm:$0xf]
        %v332 = vld [vmem:[%s221 + $0x1b8] sm:$0xf]
        %v333 = vld [vmem:[%s221 + $0x1bc] sm:$0xf]
        %v334 = vld [vmem:[%s221 + $0x1c0] sm:$0xf]
        %v335 = vld [vmem:[%s221 + $0x1c4] sm:$0xf]
        %v336 = vld [vmem:[%s221 + $0x1c8] sm:$0xf]
        %v337 = vld [vmem:[%s221 + $0x1cc] sm:$0xf]
        %v338 = vld [vmem:[%s221 + $0x1d0] sm:$0xf]
        %v339 = vld [vmem:[%s221 + $0x1d4] sm:$0xf]
        %v340 = vld [vmem:[%s221 + $0x1d8] sm:$0xf]
        %v341 = vld [vmem:[%s221 + $0x1dc] sm:$0xf]
        %v342 = vld [vmem:[%s221 + $0x1e0] sm:$0xf]
        %v343 = vld [vmem:[%s221 + $0x1e4] sm:$0xf]
        %v344 = vld [vmem:[%s221 + $0x1e8] sm:$0xf]
        %v345 = vld [vmem:[%s221 + $0x1ec] sm:$0xf]
        %v346 = vld [vmem:[%s221 + $0x1f0] sm:$0xf]
        %v347 = vld [vmem:[%s221 + $0x1f4] sm:$0xf]
        %v348 = vld [vmem:[%s221 + $0x1f8] sm:$0xf]
        %v349 = vld [vmem:[%s221 + $0x1fc] sm:$0xf]
        %v350 = vld [vmem:[%s221 + $0x200] sm:$0xf]
        %v351 = vld [vmem:[%s221 + $0x204] sm:$0xf]
        %v352 = vld [vmem:[%s221 + $0x208] sm:$0xf]
        %v353 = vld [vmem:[%s221 + $0x20c] sm:$0xf]
        %v354 = vld [vmem:[%s221 + $0x210] sm:$0xf]
        %v355 = vld [vmem:[%s221 + $0x214] sm:$0xf]
        %v356 = vld [vmem:[%s221 + $0x218] sm:$0xf]
        %v357 = vld [vmem:[%s221 + $0x21c] sm:$0xf]
        %v358 = vld [vmem:[%s221 + $0x220] sm:$0xf]
        %v359 = vld [vmem:[%s221 + $0x224] sm:$0xf]
        %v360 = vld [vmem:[%s221 + $0x228] sm:$0xf]
        %v361 = vld [vmem:[%s221 + $0x22c] sm:$0xf]
        %v362 = vld [vmem:[%s221 + $0x230] sm:$0xf]
        %v363 = vld [vmem:[%s221 + $0x234] sm:$0xf]
        %v364 = vld [vmem:[%s221 + $0x238] sm:$0xf]
        %v365 = vld [vmem:[%s221 + $0x23c] sm:$0xf]
        %v366 = vld [vmem:[%s221 + $0x240] sm:$0xf]
        %v367 = vld [vmem:[%s221 + $0x244] sm:$0xf]
        %v368 = vld [vmem:[%s221 + $0x248] sm:$0xf]
        %v369 = vld [vmem:[%s221 + $0x24c] sm:$0xf]
        %v370 = vld [vmem:[%s221 + $0x250] sm:$0xf]
        %v371 = vld [vmem:[%s221 + $0x254] sm:$0xf]
        %v372 = vld [vmem:[%s221 + $0x258] sm:$0xf]
        %v373 = vld [vmem:[%s221 + $0x25c] sm:$0xf]
        %v374 = vld [vmem:[%s221 + $0x260] sm:$0xf]
        %v375 = vld [vmem:[%s221 + $0x264] sm:$0xf]
        %v376 = vld [vmem:[%s221 + $0x268] sm:$0xf]
        %v377 = vld [vmem:[%s221 + $0x26c] sm:$0xf]
        %v378 = vld [vmem:[%s221 + $0x270] sm:$0xf]
        %v379 = vld [vmem:[%s221 + $0x274] sm:$0xf]
        %v380 = vld [vmem:[%s221 + $0x278] sm:$0xf]
        %v381 = vld [vmem:[%s221 + $0x27c] sm:$0xf]
        %v382 = vld [vmem:[%s221 + $0x280] sm:$0xf]
        %v383 = vld [vmem:[%s221 + $0x284] sm:$0xf]
        %v384 = vld [vmem:[%s221 + $0x288] sm:$0xf]
        %v385 = vld [vmem:[%s221 + $0x28c] sm:$0xf]
        %v386 = vld [vmem:[%s221 + $0x290] sm:$0xf]
        %v387 = vld [vmem:[%s221 + $0x294] sm:$0xf]
        %v388 = vld [vmem:[%s221 + $0x298] sm:$0xf]
        %v389 = vld [vmem:[%s221 + $0x29c] sm:$0xf]
        %v390 = vld [vmem:[%s221 + $0x2a0] sm:$0xf]
        %v391 = vld [vmem:[%s221 + $0x2a4] sm:$0xf]
        %v392 = vld [vmem:[%s221 + $0x2a8] sm:$0xf]
        %v393 = vld [vmem:[%s221 + $0x2ac] sm:$0xf]
        %v394 = vld [vmem:[%s221 + $0x2b0] sm:$0xf]
        %v395 = vld [vmem:[%s221 + $0x2b4] sm:$0xf]
        %v396 = vld [vmem:[%s221 + $0x2b8] sm:$0xf]
        %v397 = vld [vmem:[%s221 + $0x2bc] sm:$0xf]
        %v398 = vld [vmem:[%s221 + $0x2c0] sm:$0xf]
        %v399 = vld [vmem:[%s221 + $0x2c4] sm:$0xf]
        %v400 = vld [vmem:[%s221 + $0x2c8] sm:$0xf]
        %v401 = vld [vmem:[%s221 + $0x2cc] sm:$0xf]
        %v402 = vld [vmem:[%s221 + $0x2d0] sm:$0xf]
        %v403 = vld [vmem:[%s221 + $0x2d4] sm:$0xf]
        %v404 = vld [vmem:[%s221 + $0x2d8] sm:$0xf]
        %v405 = vld [vmem:[%s221 + $0x2dc] sm:$0xf]
        %v406 = vld [vmem:[%s221 + $0x2e0] sm:$0xf]
        %v407 = vld [vmem:[%s221 + $0x2e4] sm:$0xf]
        %v408 = vld [vmem:[%s221 + $0x2e8] sm:$0xf]
        %v409 = vld [vmem:[%s221 + $0x2ec] sm:$0xf]
        %v410 = vld [vmem:[%s221 + $0x2f0] sm:$0xf]
        %v411 = vld [vmem:[%s221 + $0x2f4] sm:$0xf]
        %v412 = vld [vmem:[%s221 + $0x2f8] sm:$0xf]
        %v413 = vld [vmem:[%s221 + $0x2fc] sm:$0xf]
        %v414 = vld [vmem:[%s221 + $0x300] sm:$0xf]
        %v415 = vld [vmem:[%s221 + $0x304] sm:$0xf]
        %v416 = vld [vmem:[%s221 + $0x308] sm:$0xf]
        %v417 = vld [vmem:[%s221 + $0x30c] sm:$0xf]
        %v418 = vld [vmem:[%s221 + $0x310] sm:$0xf]
        %v419 = vld [vmem:[%s221 + $0x314] sm:$0xf]
        %v420 = vld [vmem:[%s221 + $0x318] sm:$0xf]
        %v421 = vld [vmem:[%s221 + $0x31c] sm:$0xf]
        %v422 = vld [vmem:[%s221 + $0x320] sm:$0xf]
        %v423 = vld [vmem:[%s221 + $0x324] sm:$0xf]
        %v424 = vld [vmem:[%s221 + $0x328] sm:$0xf]
        %v425 = vld [vmem:[%s221 + $0x32c] sm:$0xf]
        %v426 = vld [vmem:[%s221 + $0x330] sm:$0xf]
        %v427 = vld [vmem:[%s221 + $0x334] sm:$0xf]
        %v428 = vld [vmem:[%s221 + $0x338] sm:$0xf]
        %v429 = vld [vmem:[%s221 + $0x33c] sm:$0xf]
        %v430 = vld [vmem:[%s221 + $0x340] sm:$0xf]
        %v431 = vld [vmem:[%s221 + $0x344] sm:$0xf]
        %v432 = vld [vmem:[%s221 + $0x348] sm:$0xf]
        %v433 = vld [vmem:[%s221 + $0x34c] sm:$0xf]
        %v434 = vld [vmem:[%s221 + $0x350] sm:$0xf]
        %v435 = vld [vmem:[%s221 + $0x354] sm:$0xf]
        %v436 = vld [vmem:[%s221 + $0x358] sm:$0xf]
        %v437 = vld [vmem:[%s221 + $0x35c] sm:$0xf]
        %v438 = vld [vmem:[%s221 + $0x360] sm:$0xf]
        %v439 = vld [vmem:[%s221 + $0x364] sm:$0xf]
        %v440 = vld [vmem:[%s221 + $0x368] sm:$0xf]
        %v441 = vld [vmem:[%s221 + $0x36c] sm:$0xf]
        %v442 = vld [vmem:[%s221 + $0x370] sm:$0xf]
        %v443 = vld [vmem:[%s221 + $0x374] sm:$0xf]
        %v444 = vld [vmem:[%s221 + $0x378] sm:$0xf]
        %v445 = vld [vmem:[%s221 + $0x37c] sm:$0xf]
        %v446 = vld [vmem:[%s221 + $0x380] sm:$0xf]
        %v447 = vld [vmem:[%s221 + $0x384] sm:$0xf]
        %v448 = vld [vmem:[%s221 + $0x388] sm:$0xf]
        %v449 = vld [vmem:[%s221 + $0x38c] sm:$0xf]
        %v450 = vld [vmem:[%s221 + $0x390] sm:$0xf]
        %v451 = vld [vmem:[%s221 + $0x394] sm:$0xf]
        %v452 = vld [vmem:[%s221 + $0x398] sm:$0xf]
        %v453 = vld [vmem:[%s221 + $0x39c] sm:$0xf]
        %v454 = vld [vmem:[%s221 + $0x3a0] sm:$0xf]
        %v455 = vld [vmem:[%s221 + $0x3a4] sm:$0xf]
        %v456 = vld [vmem:[%s221 + $0x3a8] sm:$0xf]
        %v457 = vld [vmem:[%s221 + $0x3ac] sm:$0xf]
        %v458 = vld [vmem:[%s221 + $0x3b0] sm:$0xf]
        %v459 = vld [vmem:[%s221 + $0x3b4] sm:$0xf]
        %v460 = vld [vmem:[%s221 + $0x3b8] sm:$0xf]
        %v461 = vld [vmem:[%s221 + $0x3bc] sm:$0xf]
        %v462 = vld [vmem:[%s221 + $0x3c0] sm:$0xf]
        %v463 = vld [vmem:[%s221 + $0x3c4] sm:$0xf]
        %v464 = vld [vmem:[%s221 + $0x3c8] sm:$0xf]
        %v465 = vld [vmem:[%s221 + $0x3cc] sm:$0xf]
        %v466 = vld [vmem:[%s221 + $0x3d0] sm:$0xf]
        %v467 = vld [vmem:[%s221 + $0x3d4] sm:$0xf]
        %v468 = vld [vmem:[%s221 + $0x3d8] sm:$0xf]
        %v469 = vld [vmem:[%s221 + $0x3dc] sm:$0xf]
        %v470 = vld [vmem:[%s221 + $0x3e0] sm:$0xf]
        %v471 = vld [vmem:[%s221 + $0x3e4] sm:$0xf]
        %v472 = vld [vmem:[%s221 + $0x3e8] sm:$0xf]
        %v473 = vld [vmem:[%s221 + $0x3ec] sm:$0xf]
        %v474 = vld [vmem:[%s221 + $0x3f0] sm:$0xf]
        %v475 = vld [vmem:[%s221 + $0x3f4] sm:$0xf]
        %v476 = vld [vmem:[%s221 + $0x3f8] sm:$0xf]
        %v477 = vld [vmem:[%s221 + $0x3fc] sm:$0xf]
        %v478 = vld [vmem:[#allocation2] sm:$0xff]
        %v479 = vld [vmem:[%s206] sm:$0xff]
        %v480 = vld [vmem:[%s206 + $0x8] sm:$0xff]
        %v481 = vld [vmem:[%s206 + $0x10] sm:$0xff]
        %v482 = vld [vmem:[%s206 + $0x18] sm:$0xff]
        %v483 = vld [vmem:[%s206 + $0x20] sm:$0xff]
        %v484 = vld [vmem:[%s206 + $0x28] sm:$0xff]
        %v485 = vld [vmem:[%s206 + $0x30] sm:$0xff]
        %v486 = vld [vmem:[%s206 + $0x38] sm:$0xff]
        %v487 = vld [vmem:[%s206 + $0x40] sm:$0xff]
        %v488 = vld [vmem:[%s206 + $0x48] sm:$0xff]
        %v489 = vld [vmem:[%s206 + $0x50] sm:$0xff]
        %v490 = vld [vmem:[%s206 + $0x58] sm:$0xff]
        %v491 = vld [vmem:[%s206 + $0x60] sm:$0xff]
        %v492 = vld [vmem:[%s206 + $0x68] sm:$0xff]
        %v493 = vld [vmem:[%s206 + $0x70] sm:$0xff]
        %v494 = vld [vmem:[%s206 + $0x78] sm:$0xff]
        %v495 = vunpack.c.l.bf16 %v222
        %v496 = vunpack.c.l.bf16 %v223
        %v497 = vunpack.c.l.bf16 %v224
        %v498 = vunpack.c.l.bf16 %v225
        %v499 = vunpack.c.l.bf16 %v226
        %v500 = vunpack.c.l.bf16 %v227
        %v501 = vunpack.c.l.bf16 %v228
        %v502 = vunpack.c.l.bf16 %v229
        %v503 = vunpack.c.l.bf16 %v230
        %v504 = vunpack.c.l.bf16 %v231
        %v505 = vunpack.c.l.bf16 %v232
        %v506 = vunpack.c.l.bf16 %v233
        %v507 = vunpack.c.l.bf16 %v234
        %v508 = vunpack.c.l.bf16 %v235
        %v509 = vunpack.c.l.bf16 %v236
        %v510 = vunpack.c.l.bf16 %v237
        %v511 = vunpack.c.l.bf16 %v238
        %v512 = vunpack.c.l.bf16 %v239
        %v513 = vunpack.c.l.bf16 %v240
        %v514 = vunpack.c.l.bf16 %v241
        %v515 = vunpack.c.l.bf16 %v242
        %v516 = vunpack.c.l.bf16 %v243
        %v517 = vunpack.c.l.bf16 %v244
        %v518 = vunpack.c.l.bf16 %v245
        %v519 = vunpack.c.l.bf16 %v246
        %v520 = vunpack.c.l.bf16 %v247
        %v521 = vunpack.c.l.bf16 %v248
        %v522 = vunpack.c.l.bf16 %v249
        %v523 = vunpack.c.l.bf16 %v250
        %v524 = vunpack.c.l.bf16 %v251
        %v525 = vunpack.c.l.bf16 %v252
        %v526 = vunpack.c.l.bf16 %v253
        %v527 = vunpack.c.l.bf16 %v254
        %v528 = vunpack.c.l.bf16 %v255
        %v529 = vunpack.c.l.bf16 %v256
        %v530 = vunpack.c.l.bf16 %v257
        %v531 = vunpack.c.l.bf16 %v258
        %v532 = vunpack.c.l.bf16 %v259
        %v533 = vunpack.c.l.bf16 %v260
        %v534 = vunpack.c.l.bf16 %v261
        %v535 = vunpack.c.l.bf16 %v262
        %v536 = vunpack.c.l.bf16 %v263
        %v537 = vunpack.c.l.bf16 %v264
        %v538 = vunpack.c.l.bf16 %v265
        %v539 = vunpack.c.l.bf16 %v266
        %v540 = vunpack.c.l.bf16 %v267
        %v541 = vunpack.c.l.bf16 %v268
        %v542 = vunpack.c.l.bf16 %v269
        %v543 = vunpack.c.l.bf16 %v270
        %v544 = vunpack.c.l.bf16 %v271
        %v545 = vunpack.c.l.bf16 %v272
        %v546 = vunpack.c.l.bf16 %v273
        %v547 = vunpack.c.l.bf16 %v274
        %v548 = vunpack.c.l.bf16 %v275
        %v549 = vunpack.c.l.bf16 %v276
        %v550 = vunpack.c.l.bf16 %v277
        %v551 = vunpack.c.l.bf16 %v278
        %v552 = vunpack.c.l.bf16 %v279
        %v553 = vunpack.c.l.bf16 %v280
        %v554 = vunpack.c.l.bf16 %v281
        %v555 = vunpack.c.l.bf16 %v282
        %v556 = vunpack.c.l.bf16 %v283
        %v557 = vunpack.c.l.bf16 %v284
        %v558 = vunpack.c.l.bf16 %v285
        %v559 = vunpack.c.l.bf16 %v286
        %v560 = vunpack.c.l.bf16 %v287
        %v561 = vunpack.c.l.bf16 %v288
        %v562 = vunpack.c.l.bf16 %v289
        %v563 = vunpack.c.l.bf16 %v290
        %v564 = vunpack.c.l.bf16 %v291
        %v565 = vunpack.c.l.bf16 %v292
        %v566 = vunpack.c.l.bf16 %v293
        %v567 = vunpack.c.l.bf16 %v294
        %v568 = vunpack.c.l.bf16 %v295
        %v569 = vunpack.c.l.bf16 %v296
        %v570 = vunpack.c.l.bf16 %v297
        %v571 = vunpack.c.l.bf16 %v298
        %v572 = vunpack.c.l.bf16 %v299
        %v573 = vunpack.c.l.bf16 %v300
        %v574 = vunpack.c.l.bf16 %v301
        %v575 = vunpack.c.l.bf16 %v302
        %v576 = vunpack.c.l.bf16 %v303
        %v577 = vunpack.c.l.bf16 %v304
        %v578 = vunpack.c.l.bf16 %v305
        %v579 = vunpack.c.l.bf16 %v306
        %v580 = vunpack.c.l.bf16 %v307
        %v581 = vunpack.c.l.bf16 %v308
        %v582 = vunpack.c.l.bf16 %v309
        %v583 = vunpack.c.l.bf16 %v310
        %v584 = vunpack.c.l.bf16 %v311
        %v585 = vunpack.c.l.bf16 %v312
        %v586 = vunpack.c.l.bf16 %v313
        %v587 = vunpack.c.l.bf16 %v314
        %v588 = vunpack.c.l.bf16 %v315
        %v589 = vunpack.c.l.bf16 %v316
        %v590 = vunpack.c.l.bf16 %v317
        %v591 = vunpack.c.l.bf16 %v318
        %v592 = vunpack.c.l.bf16 %v319
        %v593 = vunpack.c.l.bf16 %v320
        %v594 = vunpack.c.l.bf16 %v321
        %v595 = vunpack.c.l.bf16 %v322
        %v596 = vunpack.c.l.bf16 %v323
        %v597 = vunpack.c.l.bf16 %v324
        %v598 = vunpack.c.l.bf16 %v325
        %v599 = vunpack.c.l.bf16 %v326
        %v600 = vunpack.c.l.bf16 %v327
        %v601 = vunpack.c.l.bf16 %v328
        %v602 = vunpack.c.l.bf16 %v329
        %v603 = vunpack.c.l.bf16 %v330
        %v604 = vunpack.c.l.bf16 %v331
        %v605 = vunpack.c.l.bf16 %v332
        %v606 = vunpack.c.l.bf16 %v333
        %v607 = vunpack.c.l.bf16 %v334
        %v608 = vunpack.c.l.bf16 %v335
        %v609 = vunpack.c.l.bf16 %v336
        %v610 = vunpack.c.l.bf16 %v337
        %v611 = vunpack.c.l.bf16 %v338
        %v612 = vunpack.c.l.bf16 %v339
        %v613 = vunpack.c.l.bf16 %v340
        %v614 = vunpack.c.l.bf16 %v341
        %v615 = vunpack.c.l.bf16 %v342
        %v616 = vunpack.c.l.bf16 %v343
        %v617 = vunpack.c.l.bf16 %v344
        %v618 = vunpack.c.l.bf16 %v345
        %v619 = vunpack.c.l.bf16 %v346
        %v620 = vunpack.c.l.bf16 %v347
        %v621 = vunpack.c.l.bf16 %v348
        %v622 = vunpack.c.l.bf16 %v349
        %v623 = vunpack.c.l.bf16 %v350
        %v624 = vunpack.c.l.bf16 %v351
        %v625 = vunpack.c.l.bf16 %v352
        %v626 = vunpack.c.l.bf16 %v353
        %v627 = vunpack.c.l.bf16 %v354
        %v628 = vunpack.c.l.bf16 %v355
        %v629 = vunpack.c.l.bf16 %v356
        %v630 = vunpack.c.l.bf16 %v357
        %v631 = vunpack.c.l.bf16 %v358
        %v632 = vunpack.c.l.bf16 %v359
        %v633 = vunpack.c.l.bf16 %v360
        %v634 = vunpack.c.l.bf16 %v361
        %v635 = vunpack.c.l.bf16 %v362
        %v636 = vunpack.c.l.bf16 %v363
        %v637 = vunpack.c.l.bf16 %v364
        %v638 = vunpack.c.l.bf16 %v365
        %v639 = vunpack.c.l.bf16 %v366
        %v640 = vunpack.c.l.bf16 %v367
        %v641 = vunpack.c.l.bf16 %v368
        %v642 = vunpack.c.l.bf16 %v369
        %v643 = vunpack.c.l.bf16 %v370
        %v644 = vunpack.c.l.bf16 %v371
        %v645 = vunpack.c.l.bf16 %v372
        %v646 = vunpack.c.l.bf16 %v373
        %v647 = vunpack.c.l.bf16 %v374
        %v648 = vunpack.c.l.bf16 %v375
        %v649 = vunpack.c.l.bf16 %v376
        %v650 = vunpack.c.l.bf16 %v377
        %v651 = vunpack.c.l.bf16 %v378
        %v652 = vunpack.c.l.bf16 %v379
        %v653 = vunpack.c.l.bf16 %v380
        %v654 = vunpack.c.l.bf16 %v381
        %v655 = vunpack.c.l.bf16 %v382
        %v656 = vunpack.c.l.bf16 %v383
        %v657 = vunpack.c.l.bf16 %v384
        %v658 = vunpack.c.l.bf16 %v385
        %v659 = vunpack.c.l.bf16 %v386
        %v660 = vunpack.c.l.bf16 %v387
        %v661 = vunpack.c.l.bf16 %v388
        %v662 = vunpack.c.l.bf16 %v389
        %v663 = vunpack.c.l.bf16 %v390
        %v664 = vunpack.c.l.bf16 %v391
        %v665 = vunpack.c.l.bf16 %v392
        %v666 = vunpack.c.l.bf16 %v393
        %v667 = vunpack.c.l.bf16 %v394
        %v668 = vunpack.c.l.bf16 %v395
        %v669 = vunpack.c.l.bf16 %v396
        %v670 = vunpack.c.l.bf16 %v397
        %v671 = vunpack.c.l.bf16 %v398
        %v672 = vunpack.c.l.bf16 %v399
        %v673 = vunpack.c.l.bf16 %v400
        %v674 = vunpack.c.l.bf16 %v401
        %v675 = vunpack.c.l.bf16 %v402
        %v676 = vunpack.c.l.bf16 %v403
        %v677 = vunpack.c.l.bf16 %v404
        %v678 = vunpack.c.l.bf16 %v405
        %v679 = vunpack.c.l.bf16 %v406
        %v680 = vunpack.c.l.bf16 %v407
        %v681 = vunpack.c.l.bf16 %v408
        %v682 = vunpack.c.l.bf16 %v409
        %v683 = vunpack.c.l.bf16 %v410
        %v684 = vunpack.c.l.bf16 %v411
        %v685 = vunpack.c.l.bf16 %v412
        %v686 = vunpack.c.l.bf16 %v413
        %v687 = vunpack.c.l.bf16 %v414
        %v688 = vunpack.c.l.bf16 %v415
        %v689 = vunpack.c.l.bf16 %v416
        %v690 = vunpack.c.l.bf16 %v417
        %v691 = vunpack.c.l.bf16 %v418
        %v692 = vunpack.c.l.bf16 %v419
        %v693 = vunpack.c.l.bf16 %v420
        %v694 = vunpack.c.l.bf16 %v421
        %v695 = vunpack.c.l.bf16 %v422
        %v696 = vunpack.c.l.bf16 %v423
        %v697 = vunpack.c.l.bf16 %v424
        %v698 = vunpack.c.l.bf16 %v425
        %v699 = vunpack.c.l.bf16 %v426
        %v700 = vunpack.c.l.bf16 %v427
        %v701 = vunpack.c.l.bf16 %v428
        %v702 = vunpack.c.l.bf16 %v429
        %v703 = vunpack.c.l.bf16 %v430
        %v704 = vunpack.c.l.bf16 %v431
        %v705 = vunpack.c.l.bf16 %v432
        %v706 = vunpack.c.l.bf16 %v433
        %v707 = vunpack.c.l.bf16 %v434
        %v708 = vunpack.c.l.bf16 %v435
        %v709 = vunpack.c.l.bf16 %v436
        %v710 = vunpack.c.l.bf16 %v437
        %v711 = vunpack.c.l.bf16 %v438
        %v712 = vunpack.c.l.bf16 %v439
        %v713 = vunpack.c.l.bf16 %v440
        %v714 = vunpack.c.l.bf16 %v441
        %v715 = vunpack.c.l.bf16 %v442
        %v716 = vunpack.c.l.bf16 %v443
        %v717 = vunpack.c.l.bf16 %v444
        %v718 = vunpack.c.l.bf16 %v445
        %v719 = vunpack.c.l.bf16 %v446
        %v720 = vunpack.c.l.bf16 %v447
        %v721 = vunpack.c.l.bf16 %v448
        %v722 = vunpack.c.l.bf16 %v449
        %v723 = vunpack.c.l.bf16 %v450
        %v724 = vunpack.c.l.bf16 %v451
        %v725 = vunpack.c.l.bf16 %v452
        %v726 = vunpack.c.l.bf16 %v453
        %v727 = vunpack.c.l.bf16 %v454
        %v728 = vunpack.c.l.bf16 %v455
        %v729 = vunpack.c.l.bf16 %v456
        %v730 = vunpack.c.l.bf16 %v457
        %v731 = vunpack.c.l.bf16 %v458
        %v732 = vunpack.c.l.bf16 %v459
        %v733 = vunpack.c.l.bf16 %v460
        %v734 = vunpack.c.l.bf16 %v461
        %v735 = vunpack.c.l.bf16 %v462
        %v736 = vunpack.c.l.bf16 %v463
        %v737 = vunpack.c.l.bf16 %v464
        %v738 = vunpack.c.l.bf16 %v465
        %v739 = vunpack.c.l.bf16 %v466
        %v740 = vunpack.c.l.bf16 %v467
        %v741 = vunpack.c.l.bf16 %v468
        %v742 = vunpack.c.l.bf16 %v469
        %v743 = vunpack.c.l.bf16 %v470
        %v744 = vunpack.c.l.bf16 %v471
        %v745 = vunpack.c.l.bf16 %v472
        %v746 = vunpack.c.l.bf16 %v473
        %v747 = vunpack.c.l.bf16 %v474
        %v748 = vunpack.c.l.bf16 %v475
        %v749 = vunpack.c.l.bf16 %v476
        %v750 = vunpack.c.l.bf16 %v477
        %751 = vmatprep.subr.mxu0 0.0
        %752 = vmatpush1.msra.mxu0 %v510
        %753 = vmatprep.subr.mxu0 0.0
        %754 = vmatpush1.msra.mxu0 %v509
        %755 = vmatprep.subr.mxu0 0.0
        %756 = vmatpush1.msra.mxu0 %v508
        %757 = vmatprep.subr.mxu0 0.0
        %758 = vmatpush1.msra.mxu0 %v507
        %759 = vmatprep.subr.mxu0 0.0
        %760 = vmatpush1.msra.mxu0 %v506
        %761 = vmatprep.subr.mxu0 0.0
        %762 = vmatpush1.msra.mxu0 %v505
        %763 = vmatprep.subr.mxu0 0.0
        %764 = vmatpush1.msra.mxu0 %v504
        %765 = vmatprep.subr.mxu0 0.0
        %766 = vmatpush1.msra.mxu0 %v503
        %767 = vmatprep.subr.mxu0 0.0
        %768 = vmatpush1.msra.mxu0 %v502
        %769 = vmatprep.subr.mxu0 0.0
        %770 = vmatpush1.msra.mxu0 %v501
        %771 = vmatprep.subr.mxu0 0.0
        %772 = vmatpush1.msra.mxu0 %v500
        %773 = vmatprep.subr.mxu0 0.0
        %774 = vmatpush1.msra.mxu0 %v499
        %775 = vmatprep.subr.mxu0 0.0
        %776 = vmatpush1.msra.mxu0 %v498
        %777 = vmatprep.subr.mxu0 0.0
        %778 = vmatpush1.msra.mxu0 %v497
        %779 = vmatprep.subr.mxu0 0.0
        %780 = vmatpush1.msra.mxu0 %v496
        %781 = vmatprep.subr.mxu0 0.0
        %782 = vmatpush1.msra.mxu0 %v495
        %783 = vmatprep.subr.mxu0 0.0
        %784 = vmatpush2.msra.mxu0 %v526
        %785 = vmatprep.subr.mxu0 0.0
        %786 = vmatpush2.msra.mxu0 %v525
        %787 = vmatprep.subr.mxu0 0.0
        %788 = vmatpush2.msra.mxu0 %v524
        %789 = vmatprep.subr.mxu0 0.0
        %790 = vmatpush2.msra.mxu0 %v523
        %791 = vmatprep.subr.mxu0 0.0
        %792 = vmatpush2.msra.mxu0 %v522
        %793 = vmatprep.subr.mxu0 0.0
        %794 = vmatpush2.msra.mxu0 %v521
        %795 = vmatprep.subr.mxu0 0.0
        %796 = vmatpush2.msra.mxu0 %v520
        %797 = vmatprep.subr.mxu0 0.0
        %798 = vmatpush2.msra.mxu0 %v519
        %799 = vmatprep.subr.mxu0 0.0
        %800 = vmatpush2.msra.mxu0 %v518
        %801 = vmatprep.subr.mxu0 0.0
        %802 = vmatpush2.msra.mxu0 %v517
        %803 = vmatprep.subr.mxu0 0.0
        %804 = vmatpush2.msra.mxu0 %v516
        %805 = vmatprep.subr.mxu0 0.0
        %806 = vmatpush2.msra.mxu0 %v515
        %807 = vmatprep.subr.mxu0 0.0
        %808 = vmatpush2.msra.mxu0 %v514
        %809 = vmatprep.subr.mxu0 0.0
        %810 = vmatpush2.msra.mxu0 %v513
        %811 = vmatprep.subr.mxu0 0.0
        %812 = vmatpush2.msra.mxu0 %v512
        %813 = vmatprep.subr.mxu0 0.0
        %814 = vmatpush2.msra.mxu0 %v511
        %815 = vmatprep.mubr.f32.mxu0 %v480
        %816 = vmatmul.mubr.f32.gmra.mxu0 %v479
        %v817 = vpop.f32.mrf.mxu0
        %v818 = vadd.f32 0.0, %v817
        %v819 = vpop.f32.mrf.mxu0
        %820 = vdwg.mxu0
        %821 = vmatprep.subr.mxu0 0.0
        %822 = vmatpush1.msra.mxu0 %v542
        %823 = vmatprep.subr.mxu0 0.0
        %824 = vmatpush1.msra.mxu0 %v541
        %825 = vmatprep.subr.mxu0 0.0
        %826 = vmatpush1.msra.mxu0 %v540
        %827 = vmatprep.subr.mxu0 0.0
        %828 = vmatpush1.msra.mxu0 %v539
        %829 = vmatprep.subr.mxu0 0.0
        %830 = vmatpush1.msra.mxu0 %v538
        %831 = vmatprep.subr.mxu0 0.0
        %832 = vmatpush1.msra.mxu0 %v537
        %833 = vmatprep.subr.mxu0 0.0
        %834 = vmatpush1.msra.mxu0 %v536
        %835 = vmatprep.subr.mxu0 0.0
        %836 = vmatpush1.msra.mxu0 %v535
        %837 = vmatprep.subr.mxu0 0.0
        %838 = vmatpush1.msra.mxu0 %v534
        %839 = vmatprep.subr.mxu0 0.0
        %840 = vmatpush1.msra.mxu0 %v533
        %841 = vmatprep.subr.mxu0 0.0
        %842 = vmatpush1.msra.mxu0 %v532
        %843 = vmatprep.subr.mxu0 0.0
        %844 = vmatpush1.msra.mxu0 %v531
        %845 = vmatprep.subr.mxu0 0.0
        %846 = vmatpush1.msra.mxu0 %v530
        %847 = vmatprep.subr.mxu0 0.0
        %848 = vmatpush1.msra.mxu0 %v529
        %849 = vmatprep.subr.mxu0 0.0
        %850 = vmatpush1.msra.mxu0 %v528
        %851 = vmatprep.subr.mxu0 0.0
        %852 = vmatpush1.msra.mxu0 %v527
        %853 = vmatprep.subr.mxu0 0.0
        %854 = vmatpush2.msra.mxu0 %v558
        %855 = vmatprep.subr.mxu0 0.0
        %856 = vmatpush2.msra.mxu0 %v557
        %857 = vmatprep.subr.mxu0 0.0
        %858 = vmatpush2.msra.mxu0 %v556
        %859 = vmatprep.subr.mxu0 0.0
        %860 = vmatpush2.msra.mxu0 %v555
        %861 = vmatprep.subr.mxu0 0.0
        %862 = vmatpush2.msra.mxu0 %v554
        %863 = vmatprep.subr.mxu0 0.0
        %864 = vmatpush2.msra.mxu0 %v553
        %865 = vmatprep.subr.mxu0 0.0
        %866 = vmatpush2.msra.mxu0 %v552
        %867 = vmatprep.subr.mxu0 0.0
        %868 = vmatpush2.msra.mxu0 %v551
        %869 = vmatprep.subr.mxu0 0.0
        %870 = vmatpush2.msra.mxu0 %v550
        %871 = vmatprep.subr.mxu0 0.0
        %872 = vmatpush2.msra.mxu0 %v549
        %873 = vmatprep.subr.mxu0 0.0
        %874 = vmatpush2.msra.mxu0 %v548
        %875 = vmatprep.subr.mxu0 0.0
        %876 = vmatpush2.msra.mxu0 %v547
        %877 = vmatprep.subr.mxu0 0.0
        %878 = vmatpush2.msra.mxu0 %v546
        %879 = vmatprep.subr.mxu0 0.0
        %880 = vmatpush2.msra.mxu0 %v545
        %881 = vmatprep.subr.mxu0 0.0
        %882 = vmatpush2.msra.mxu0 %v544
        %883 = vmatprep.subr.mxu0 0.0
        %884 = vmatpush2.msra.mxu0 %v543
        %885 = vmatprep.mubr.f32.mxu0 %v482
        %886 = vmatmul.mubr.f32.gmra.mxu0 %v481
        %v887 = vpop.f32.mrf.mxu0
        %v888 = vadd.f32 %v818, %v887
        %v889 = vpop.f32.mrf.mxu0
        %890 = vdwg.mxu0
        %891 = vmatprep.subr.mxu0 0.0
        %892 = vmatpush1.msra.mxu0 %v574
        %893 = vmatprep.subr.mxu0 0.0
        %894 = vmatpush1.msra.mxu0 %v573
        %895 = vmatprep.subr.mxu0 0.0
        %896 = vmatpush1.msra.mxu0 %v572
        %897 = vmatprep.subr.mxu0 0.0
        %898 = vmatpush1.msra.mxu0 %v571
        %899 = vmatprep.subr.mxu0 0.0
        %900 = vmatpush1.msra.mxu0 %v570
        %901 = vmatprep.subr.mxu0 0.0
        %902 = vmatpush1.msra.mxu0 %v569
        %903 = vmatprep.subr.mxu0 0.0
        %904 = vmatpush1.msra.mxu0 %v568
        %905 = vmatprep.subr.mxu0 0.0
        %906 = vmatpush1.msra.mxu0 %v567
        %907 = vmatprep.subr.mxu0 0.0
        %908 = vmatpush1.msra.mxu0 %v566
        %909 = vmatprep.subr.mxu0 0.0
        %910 = vmatpush1.msra.mxu0 %v565
        %911 = vmatprep.subr.mxu0 0.0
        %912 = vmatpush1.msra.mxu0 %v564
        %913 = vmatprep.subr.mxu0 0.0
        %914 = vmatpush1.msra.mxu0 %v563
        %915 = vmatprep.subr.mxu0 0.0
        %916 = vmatpush1.msra.mxu0 %v562
        %917 = vmatprep.subr.mxu0 0.0
        %918 = vmatpush1.msra.mxu0 %v561
        %919 = vmatprep.subr.mxu0 0.0
        %920 = vmatpush1.msra.mxu0 %v560
        %921 = vmatprep.subr.mxu0 0.0
        %922 = vmatpush1.msra.mxu0 %v559
        %923 = vmatprep.subr.mxu0 0.0
        %924 = vmatpush2.msra.mxu0 %v590
        %925 = vmatprep.subr.mxu0 0.0
        %926 = vmatpush2.msra.mxu0 %v589
        %927 = vmatprep.subr.mxu0 0.0
        %928 = vmatpush2.msra.mxu0 %v588
        %929 = vmatprep.subr.mxu0 0.0
        %930 = vmatpush2.msra.mxu0 %v587
        %931 = vmatprep.subr.mxu0 0.0
        %932 = vmatpush2.msra.mxu0 %v586
        %933 = vmatprep.subr.mxu0 0.0
        %934 = vmatpush2.msra.mxu0 %v585
        %935 = vmatprep.subr.mxu0 0.0
        %936 = vmatpush2.msra.mxu0 %v584
        %937 = vmatprep.subr.mxu0 0.0
        %938 = vmatpush2.msra.mxu0 %v583
        %939 = vmatprep.subr.mxu0 0.0
        %940 = vmatpush2.msra.mxu0 %v582
        %941 = vmatprep.subr.mxu0 0.0
        %942 = vmatpush2.msra.mxu0 %v581
        %943 = vmatprep.subr.mxu0 0.0
        %944 = vmatpush2.msra.mxu0 %v580
        %945 = vmatprep.subr.mxu0 0.0
        %946 = vmatpush2.msra.mxu0 %v579
        %947 = vmatprep.subr.mxu0 0.0
        %948 = vmatpush2.msra.mxu0 %v578
        %949 = vmatprep.subr.mxu0 0.0
        %950 = vmatpush2.msra.mxu0 %v577
        %951 = vmatprep.subr.mxu0 0.0
        %952 = vmatpush2.msra.mxu0 %v576
        %953 = vmatprep.subr.mxu0 0.0
        %954 = vmatpush2.msra.mxu0 %v575
        %955 = vmatprep.mubr.f32.mxu0 %v484
        %956 = vmatmul.mubr.f32.gmra.mxu0 %v483
        %v957 = vpop.f32.mrf.mxu0
        %v958 = vadd.f32 %v888, %v957
        %v959 = vpop.f32.mrf.mxu0
        %960 = vdwg.mxu0
        %961 = vmatprep.subr.mxu0 0.0
        %962 = vmatpush1.msra.mxu0 %v606
        %963 = vmatprep.subr.mxu0 0.0
        %964 = vmatpush1.msra.mxu0 %v605
        %965 = vmatprep.subr.mxu0 0.0
        %966 = vmatpush1.msra.mxu0 %v604
        %967 = vmatprep.subr.mxu0 0.0
        %968 = vmatpush1.msra.mxu0 %v603
        %969 = vmatprep.subr.mxu0 0.0
        %970 = vmatpush1.msra.mxu0 %v602
        %971 = vmatprep.subr.mxu0 0.0
        %972 = vmatpush1.msra.mxu0 %v601
        %973 = vmatprep.subr.mxu0 0.0
        %974 = vmatpush1.msra.mxu0 %v600
        %975 = vmatprep.subr.mxu0 0.0
        %976 = vmatpush1.msra.mxu0 %v599
        %977 = vmatprep.subr.mxu0 0.0
        %978 = vmatpush1.msra.mxu0 %v598
        %979 = vmatprep.subr.mxu0 0.0
        %980 = vmatpush1.msra.mxu0 %v597
        %981 = vmatprep.subr.mxu0 0.0
        %982 = vmatpush1.msra.mxu0 %v596
        %983 = vmatprep.subr.mxu0 0.0
        %984 = vmatpush1.msra.mxu0 %v595
        %985 = vmatprep.subr.mxu0 0.0
        %986 = vmatpush1.msra.mxu0 %v594
        %987 = vmatprep.subr.mxu0 0.0
        %988 = vmatpush1.msra.mxu0 %v593
        %989 = vmatprep.subr.mxu0 0.0
        %990 = vmatpush1.msra.mxu0 %v592
        %991 = vmatprep.subr.mxu0 0.0
        %992 = vmatpush1.msra.mxu0 %v591
        %993 = vmatprep.subr.mxu0 0.0
        %994 = vmatpush2.msra.mxu0 %v622
        %995 = vmatprep.subr.mxu0 0.0
        %996 = vmatpush2.msra.mxu0 %v621
        %997 = vmatprep.subr.mxu0 0.0
        %998 = vmatpush2.msra.mxu0 %v620
        %999 = vmatprep.subr.mxu0 0.0
        %1000 = vmatpush2.msra.mxu0 %v619
        %1001 = vmatprep.subr.mxu0 0.0
        %1002 = vmatpush2.msra.mxu0 %v618
        %1003 = vmatprep.subr.mxu0 0.0
        %1004 = vmatpush2.msra.mxu0 %v617
        %1005 = vmatprep.subr.mxu0 0.0
        %1006 = vmatpush2.msra.mxu0 %v616
        %1007 = vmatprep.subr.mxu0 0.0
        %1008 = vmatpush2.msra.mxu0 %v615
        %1009 = vmatprep.subr.mxu0 0.0
        %1010 = vmatpush2.msra.mxu0 %v614
        %1011 = vmatprep.subr.mxu0 0.0
        %1012 = vmatpush2.msra.mxu0 %v613
        %1013 = vmatprep.subr.mxu0 0.0
        %1014 = vmatpush2.msra.mxu0 %v612
        %1015 = vmatprep.subr.mxu0 0.0
        %1016 = vmatpush2.msra.mxu0 %v611
        %1017 = vmatprep.subr.mxu0 0.0
        %1018 = vmatpush2.msra.mxu0 %v610
        %1019 = vmatprep.subr.mxu0 0.0
        %1020 = vmatpush2.msra.mxu0 %v609
        %1021 = vmatprep.subr.mxu0 0.0
        %1022 = vmatpush2.msra.mxu0 %v608
        %1023 = vmatprep.subr.mxu0 0.0
        %1024 = vmatpush2.msra.mxu0 %v607
        %1025 = vmatprep.mubr.f32.mxu0 %v486
        %1026 = vmatmul.mubr.f32.gmra.mxu0 %v485
        %v1027 = vpop.f32.mrf.mxu0
        %v1028 = vadd.f32 %v958, %v1027
        %v1029 = vpop.f32.mrf.mxu0
        %1030 = vdwg.mxu0
        %1031 = vmatprep.subr.mxu0 0.0
        %1032 = vmatpush1.msra.mxu0 %v638
        %1033 = vmatprep.subr.mxu0 0.0
        %1034 = vmatpush1.msra.mxu0 %v637
        %1035 = vmatprep.subr.mxu0 0.0
        %1036 = vmatpush1.msra.mxu0 %v636
        %1037 = vmatprep.subr.mxu0 0.0
        %1038 = vmatpush1.msra.mxu0 %v635
        %1039 = vmatprep.subr.mxu0 0.0
        %1040 = vmatpush1.msra.mxu0 %v634
        %1041 = vmatprep.subr.mxu0 0.0
        %1042 = vmatpush1.msra.mxu0 %v633
        %1043 = vmatprep.subr.mxu0 0.0
        %1044 = vmatpush1.msra.mxu0 %v632
        %1045 = vmatprep.subr.mxu0 0.0
        %1046 = vmatpush1.msra.mxu0 %v631
        %1047 = vmatprep.subr.mxu0 0.0
        %1048 = vmatpush1.msra.mxu0 %v630
        %1049 = vmatprep.subr.mxu0 0.0
        %1050 = vmatpush1.msra.mxu0 %v629
        %1051 = vmatprep.subr.mxu0 0.0
        %1052 = vmatpush1.msra.mxu0 %v628
        %1053 = vmatprep.subr.mxu0 0.0
        %1054 = vmatpush1.msra.mxu0 %v627
        %1055 = vmatprep.subr.mxu0 0.0
        %1056 = vmatpush1.msra.mxu0 %v626
        %1057 = vmatprep.subr.mxu0 0.0
        %1058 = vmatpush1.msra.mxu0 %v625
        %1059 = vmatprep.subr.mxu0 0.0
        %1060 = vmatpush1.msra.mxu0 %v624
        %1061 = vmatprep.subr.mxu0 0.0
        %1062 = vmatpush1.msra.mxu0 %v623
        %1063 = vmatprep.subr.mxu0 0.0
        %1064 = vmatpush2.msra.mxu0 %v654
        %1065 = vmatprep.subr.mxu0 0.0
        %1066 = vmatpush2.msra.mxu0 %v653
        %1067 = vmatprep.subr.mxu0 0.0
        %1068 = vmatpush2.msra.mxu0 %v652
        %1069 = vmatprep.subr.mxu0 0.0
        %1070 = vmatpush2.msra.mxu0 %v651
        %1071 = vmatprep.subr.mxu0 0.0
        %1072 = vmatpush2.msra.mxu0 %v650
        %1073 = vmatprep.subr.mxu0 0.0
        %1074 = vmatpush2.msra.mxu0 %v649
        %1075 = vmatprep.subr.mxu0 0.0
        %1076 = vmatpush2.msra.mxu0 %v648
        %1077 = vmatprep.subr.mxu0 0.0
        %1078 = vmatpush2.msra.mxu0 %v647
        %1079 = vmatprep.subr.mxu0 0.0
        %1080 = vmatpush2.msra.mxu0 %v646
        %1081 = vmatprep.subr.mxu0 0.0
        %1082 = vmatpush2.msra.mxu0 %v645
        %1083 = vmatprep.subr.mxu0 0.0
        %1084 = vmatpush2.msra.mxu0 %v644
        %1085 = vmatprep.subr.mxu0 0.0
        %1086 = vmatpush2.msra.mxu0 %v643
        %1087 = vmatprep.subr.mxu0 0.0
        %1088 = vmatpush2.msra.mxu0 %v642
        %1089 = vmatprep.subr.mxu0 0.0
        %1090 = vmatpush2.msra.mxu0 %v641
        %1091 = vmatprep.subr.mxu0 0.0
        %1092 = vmatpush2.msra.mxu0 %v640
        %1093 = vmatprep.subr.mxu0 0.0
        %1094 = vmatpush2.msra.mxu0 %v639
        %1095 = vmatprep.mubr.f32.mxu0 %v488
        %1096 = vmatmul.mubr.f32.gmra.mxu0 %v487
        %v1097 = vpop.f32.mrf.mxu0
        %v1098 = vadd.f32 %v1028, %v1097
        %v1099 = vpop.f32.mrf.mxu0
        %1100 = vdwg.mxu0
        %1101 = vmatprep.subr.mxu0 0.0
        %1102 = vmatpush1.msra.mxu0 %v670
        %1103 = vmatprep.subr.mxu0 0.0
        %1104 = vmatpush1.msra.mxu0 %v669
        %1105 = vmatprep.subr.mxu0 0.0
        %1106 = vmatpush1.msra.mxu0 %v668
        %1107 = vmatprep.subr.mxu0 0.0
        %1108 = vmatpush1.msra.mxu0 %v667
        %1109 = vmatprep.subr.mxu0 0.0
        %1110 = vmatpush1.msra.mxu0 %v666
        %1111 = vmatprep.subr.mxu0 0.0
        %1112 = vmatpush1.msra.mxu0 %v665
        %1113 = vmatprep.subr.mxu0 0.0
        %1114 = vmatpush1.msra.mxu0 %v664
        %1115 = vmatprep.subr.mxu0 0.0
        %1116 = vmatpush1.msra.mxu0 %v663
        %1117 = vmatprep.subr.mxu0 0.0
        %1118 = vmatpush1.msra.mxu0 %v662
        %1119 = vmatprep.subr.mxu0 0.0
        %1120 = vmatpush1.msra.mxu0 %v661
        %1121 = vmatprep.subr.mxu0 0.0
        %1122 = vmatpush1.msra.mxu0 %v660
        %1123 = vmatprep.subr.mxu0 0.0
        %1124 = vmatpush1.msra.mxu0 %v659
        %1125 = vmatprep.subr.mxu0 0.0
        %1126 = vmatpush1.msra.mxu0 %v658
        %1127 = vmatprep.subr.mxu0 0.0
        %1128 = vmatpush1.msra.mxu0 %v657
        %1129 = vmatprep.subr.mxu0 0.0
        %1130 = vmatpush1.msra.mxu0 %v656
        %1131 = vmatprep.subr.mxu0 0.0
        %1132 = vmatpush1.msra.mxu0 %v655
        %1133 = vmatprep.subr.mxu0 0.0
        %1134 = vmatpush2.msra.mxu0 %v686
        %1135 = vmatprep.subr.mxu0 0.0
        %1136 = vmatpush2.msra.mxu0 %v685
        %1137 = vmatprep.subr.mxu0 0.0
        %1138 = vmatpush2.msra.mxu0 %v684
        %1139 = vmatprep.subr.mxu0 0.0
        %1140 = vmatpush2.msra.mxu0 %v683
        %1141 = vmatprep.subr.mxu0 0.0
        %1142 = vmatpush2.msra.mxu0 %v682
        %1143 = vmatprep.subr.mxu0 0.0
        %1144 = vmatpush2.msra.mxu0 %v681
        %1145 = vmatprep.subr.mxu0 0.0
        %1146 = vmatpush2.msra.mxu0 %v680
        %1147 = vmatprep.subr.mxu0 0.0
        %1148 = vmatpush2.msra.mxu0 %v679
        %1149 = vmatprep.subr.mxu0 0.0
        %1150 = vmatpush2.msra.mxu0 %v678
        %1151 = vmatprep.subr.mxu0 0.0
        %1152 = vmatpush2.msra.mxu0 %v677
        %1153 = vmatprep.subr.mxu0 0.0
        %1154 = vmatpush2.msra.mxu0 %v676
        %1155 = vmatprep.subr.mxu0 0.0
        %1156 = vmatpush2.msra.mxu0 %v675
        %1157 = vmatprep.subr.mxu0 0.0
        %1158 = vmatpush2.msra.mxu0 %v674
        %1159 = vmatprep.subr.mxu0 0.0
        %1160 = vmatpush2.msra.mxu0 %v673
        %1161 = vmatprep.subr.mxu0 0.0
        %1162 = vmatpush2.msra.mxu0 %v672
        %1163 = vmatprep.subr.mxu0 0.0
        %1164 = vmatpush2.msra.mxu0 %v671
        %1165 = vmatprep.mubr.f32.mxu0 %v490
        %1166 = vmatmul.mubr.f32.gmra.mxu0 %v489
        %v1167 = vpop.f32.mrf.mxu0
        %v1168 = vadd.f32 %v1098, %v1167
        %v1169 = vpop.f32.mrf.mxu0
        %1170 = vdwg.mxu0
        %1171 = vmatprep.subr.mxu0 0.0
        %1172 = vmatpush1.msra.mxu0 %v702
        %1173 = vmatprep.subr.mxu0 0.0
        %1174 = vmatpush1.msra.mxu0 %v701
        %1175 = vmatprep.subr.mxu0 0.0
        %1176 = vmatpush1.msra.mxu0 %v700
        %1177 = vmatprep.subr.mxu0 0.0
        %1178 = vmatpush1.msra.mxu0 %v699
        %1179 = vmatprep.subr.mxu0 0.0
        %1180 = vmatpush1.msra.mxu0 %v698
        %1181 = vmatprep.subr.mxu0 0.0
        %1182 = vmatpush1.msra.mxu0 %v697
        %1183 = vmatprep.subr.mxu0 0.0
        %1184 = vmatpush1.msra.mxu0 %v696
        %1185 = vmatprep.subr.mxu0 0.0
        %1186 = vmatpush1.msra.mxu0 %v695
        %1187 = vmatprep.subr.mxu0 0.0
        %1188 = vmatpush1.msra.mxu0 %v694
        %1189 = vmatprep.subr.mxu0 0.0
        %1190 = vmatpush1.msra.mxu0 %v693
        %1191 = vmatprep.subr.mxu0 0.0
        %1192 = vmatpush1.msra.mxu0 %v692
        %1193 = vmatprep.subr.mxu0 0.0
        %1194 = vmatpush1.msra.mxu0 %v691
        %1195 = vmatprep.subr.mxu0 0.0
        %1196 = vmatpush1.msra.mxu0 %v690
        %1197 = vmatprep.subr.mxu0 0.0
        %1198 = vmatpush1.msra.mxu0 %v689
        %1199 = vmatprep.subr.mxu0 0.0
        %1200 = vmatpush1.msra.mxu0 %v688
        %1201 = vmatprep.subr.mxu0 0.0
        %1202 = vmatpush1.msra.mxu0 %v687
        %1203 = vmatprep.subr.mxu0 0.0
        %1204 = vmatpush2.msra.mxu0 %v718
        %1205 = vmatprep.subr.mxu0 0.0
        %1206 = vmatpush2.msra.mxu0 %v717
        %1207 = vmatprep.subr.mxu0 0.0
        %1208 = vmatpush2.msra.mxu0 %v716
        %1209 = vmatprep.subr.mxu0 0.0
        %1210 = vmatpush2.msra.mxu0 %v715
        %1211 = vmatprep.subr.mxu0 0.0
        %1212 = vmatpush2.msra.mxu0 %v714
        %1213 = vmatprep.subr.mxu0 0.0
        %1214 = vmatpush2.msra.mxu0 %v713
        %1215 = vmatprep.subr.mxu0 0.0
        %1216 = vmatpush2.msra.mxu0 %v712
        %1217 = vmatprep.subr.mxu0 0.0
        %1218 = vmatpush2.msra.mxu0 %v711
        %1219 = vmatprep.subr.mxu0 0.0
        %1220 = vmatpush2.msra.mxu0 %v710
        %1221 = vmatprep.subr.mxu0 0.0
        %1222 = vmatpush2.msra.mxu0 %v709
        %1223 = vmatprep.subr.mxu0 0.0
        %1224 = vmatpush2.msra.mxu0 %v708
        %1225 = vmatprep.subr.mxu0 0.0
        %1226 = vmatpush2.msra.mxu0 %v707
        %1227 = vmatprep.subr.mxu0 0.0
        %1228 = vmatpush2.msra.mxu0 %v706
        %1229 = vmatprep.subr.mxu0 0.0
        %1230 = vmatpush2.msra.mxu0 %v705
        %1231 = vmatprep.subr.mxu0 0.0
        %1232 = vmatpush2.msra.mxu0 %v704
        %1233 = vmatprep.subr.mxu0 0.0
        %1234 = vmatpush2.msra.mxu0 %v703
        %1235 = vmatprep.mubr.f32.mxu0 %v492
        %1236 = vmatmul.mubr.f32.gmra.mxu0 %v491
        %v1237 = vpop.f32.mrf.mxu0
        %v1238 = vadd.f32 %v1168, %v1237
        %v1239 = vpop.f32.mrf.mxu0
        %1240 = vdwg.mxu0
        %1241 = vmatprep.subr.mxu0 0.0
        %1242 = vmatpush1.msra.mxu0 %v734
        %1243 = vmatprep.subr.mxu0 0.0
        %1244 = vmatpush1.msra.mxu0 %v733
        %1245 = vmatprep.subr.mxu0 0.0
        %1246 = vmatpush1.msra.mxu0 %v732
        %1247 = vmatprep.subr.mxu0 0.0
        %1248 = vmatpush1.msra.mxu0 %v731
        %1249 = vmatprep.subr.mxu0 0.0
        %1250 = vmatpush1.msra.mxu0 %v730
        %1251 = vmatprep.subr.mxu0 0.0
        %1252 = vmatpush1.msra.mxu0 %v729
        %1253 = vmatprep.subr.mxu0 0.0
        %1254 = vmatpush1.msra.mxu0 %v728
        %1255 = vmatprep.subr.mxu0 0.0
        %1256 = vmatpush1.msra.mxu0 %v727
        %1257 = vmatprep.subr.mxu0 0.0
        %1258 = vmatpush1.msra.mxu0 %v726
        %1259 = vmatprep.subr.mxu0 0.0
        %1260 = vmatpush1.msra.mxu0 %v725
        %1261 = vmatprep.subr.mxu0 0.0
        %1262 = vmatpush1.msra.mxu0 %v724
        %1263 = vmatprep.subr.mxu0 0.0
        %1264 = vmatpush1.msra.mxu0 %v723
        %1265 = vmatprep.subr.mxu0 0.0
        %1266 = vmatpush1.msra.mxu0 %v722
        %1267 = vmatprep.subr.mxu0 0.0
        %1268 = vmatpush1.msra.mxu0 %v721
        %1269 = vmatprep.subr.mxu0 0.0
        %1270 = vmatpush1.msra.mxu0 %v720
        %1271 = vmatprep.subr.mxu0 0.0
        %1272 = vmatpush1.msra.mxu0 %v719
        %1273 = vmatprep.subr.mxu0 0.0
        %1274 = vmatpush2.msra.mxu0 %v750
        %1275 = vmatprep.subr.mxu0 0.0
        %1276 = vmatpush2.msra.mxu0 %v749
        %1277 = vmatprep.subr.mxu0 0.0
        %1278 = vmatpush2.msra.mxu0 %v748
        %1279 = vmatprep.subr.mxu0 0.0
        %1280 = vmatpush2.msra.mxu0 %v747
        %1281 = vmatprep.subr.mxu0 0.0
        %1282 = vmatpush2.msra.mxu0 %v746
        %1283 = vmatprep.subr.mxu0 0.0
        %1284 = vmatpush2.msra.mxu0 %v745
        %1285 = vmatprep.subr.mxu0 0.0
        %1286 = vmatpush2.msra.mxu0 %v744
        %1287 = vmatprep.subr.mxu0 0.0
        %1288 = vmatpush2.msra.mxu0 %v743
        %1289 = vmatprep.subr.mxu0 0.0
        %1290 = vmatpush2.msra.mxu0 %v742
        %1291 = vmatprep.subr.mxu0 0.0
        %1292 = vmatpush2.msra.mxu0 %v741
        %1293 = vmatprep.subr.mxu0 0.0
        %1294 = vmatpush2.msra.mxu0 %v740
        %1295 = vmatprep.subr.mxu0 0.0
        %1296 = vmatpush2.msra.mxu0 %v739
        %1297 = vmatprep.subr.mxu0 0.0
        %1298 = vmatpush2.msra.mxu0 %v738
        %1299 = vmatprep.subr.mxu0 0.0
        %1300 = vmatpush2.msra.mxu0 %v737
        %1301 = vmatprep.subr.mxu0 0.0
        %1302 = vmatpush2.msra.mxu0 %v736
        %1303 = vmatprep.subr.mxu0 0.0
        %1304 = vmatpush2.msra.mxu0 %v735
        %1305 = vmatprep.mubr.f32.mxu0 %v494
        %1306 = vmatmul.mubr.f32.gmra.mxu0 %v493
        %v1307 = vpop.f32.mrf.mxu0
        %v1308 = vadd.f32 %v1238, %v1307
        %v1309 = vpop.f32.mrf.mxu0
        %1310 = vdwg.mxu0
        %v1311 = vadd.f32 %v478, %v1308
        %1312 = vst [vmem:[#allocation2] sm:$0xff] %v1311
        %p1313 = scmp.eq.s32.totalorder %s20, 1
        // Predicated region
        $region41: #{adaptive_avg_pool2d.1} parent=31 // pred_check
          %p1314 = pneg %p1313
        $region42: #{adaptive_avg_pool2d.1} parent=31 // pred_check_branch
          %1316 = sbr.rel (%p1314) target = $region44
        $region43: #{adaptive_avg_pool2d.1} parent=31 // pred_region
          %v1317 = vld [vmem:[#allocation2] sm:$0xff]
          %v1318 = vld [vmem:[%s2] sm:$0x1]
          %v1320 = vlaneseq
          %v1321 = vshrl.u32 %v1320, 7
          %v1322 = vsub.s32 0, %v1321
          %v1323 = vrot.slane %v1318, %v1322
          %v1325 = vmul.f32 %v1317, %v1323
          %1326 = vst [vmem:[%s211] sm:$0xff] %v1325
        $region44: #{adaptive_avg_pool2d.1} parent=31 // pred_fallthru
          _
        %p1327 = scmp.lt.s32.totalorder %s19, 0
        %s1328 = scalar_select %p1327, %s19, 0
        %s1329 = smul.addr %s1328, 8
        %s1330 = scalar_lea.vmem %s3, %s1329
        // Predicated region
        $region45: #{adaptive_avg_pool2d.1} parent=31 // pred_check
          %p1331 = pneg %p115
        $region46: #{adaptive_avg_pool2d.1} parent=31 // pred_check_branch
          %1333 = sbr.rel (%p1331) target = $region48
        $region47: #{adaptive_avg_pool2d.1} parent=31 // pred_region
          _
        $region48: #{adaptive_avg_pool2d.1} parent=31 // pred_fallthru
          _
        // Predicated region
        $region49: #{adaptive_avg_pool2d.1} parent=31 // pred_check
          %p1334 = pneg %p115
        $region50: #{adaptive_avg_pool2d.1} parent=31 // pred_check_branch
          %1336 = sbr.rel (%p1334) target = $region52
        $region51: #{adaptive_avg_pool2d.1} parent=31 // pred_region
          %p1337 = scmp.lt.s32.totalorder %s19, 0
          %s1338 = scalar_select %p1337, %s19, 0
          %s1339 = smul.addr %s1338, 8
          %s1340 = scalar_lea.vmem %s3, %s1339
        $region52: #{adaptive_avg_pool2d.1} parent=31 // pred_fallthru
          _
      $region32: #{adaptive_avg_pool2d.1} parent=5 // pred_fallthru
        _
      %p1341 = scmp.le.s32.totalorder 2, %s10
      // Predicated region
      $region53: #{adaptive_avg_pool2d.1} parent=5 // pred_check
        %p1342 = pneg %p1341
      $region54: #{adaptive_avg_pool2d.1} parent=5 // pred_check_branch
        %1344 = sbr.rel (%p1342) target = $region56
      $region55: #{adaptive_avg_pool2d.1} parent=5 // pred_region
        %s1345 = ssub.s32 %s10, 2
      $region56: #{adaptive_avg_pool2d.1} parent=5 // pred_fallthru
        _
    $region6: #{adaptive_avg_pool2d.1} parent=1 // loop_footer
      %s14 = sadd.s32 1, %s10
    $region7: #{adaptive_avg_pool2d.1} parent=1 // loop_footer_branch
      %9 = sbr.rel target = $region3
    $region8: #{adaptive_avg_pool2d.1} parent=1 // loop_exit
      _
    %1346 = vsyncpa [#allocation4], 1
    %s1347 = scalar_lea.sflag [#allocation4], 1
    %1348 = vsyncpa %s1347, 1

</llo_original>
